<compile_context>
chip_gen: v7x
topology: tpu7x:2x2x1
jax: 0.10.0
libtpu: 0.0.40
codegen_flags: <defaults>
</compile_context>

<pallas_src>
import functools

import jax
import jax.numpy as jnp
from jax.experimental import pallas as pl
from jax.experimental.pallas import tpu as pltpu


def _mlp_res_block_kernel(*refs, gs, eps, pow2_groups):
    """One batch tile: out = x + mlp2(SiLU(GN2(mlp1(SiLU(GN1(x))))))."""
    if pow2_groups:
        x_ref, vec_ref, w1_ref, w2_ref, out_ref = refs
        proj = None
    else:
        x_ref, vec_ref, proj_ref, w1_ref, w2_ref, out_ref = refs
        proj = proj_ref[...]                       # (Cp, Cp) f32 averaging projector

    x = x_ref[...].astype(jnp.float32)             # (TB, Cp)
    vecs = vec_ref[...]                            # (8,Cp): g1,b1,bias1,g2,b2,bias2,pad
    gamma1, beta1, b1 = vecs[0:1], vecs[1:2], vecs[2:3]
    gamma2, beta2, b2 = vecs[3:4], vecs[4:5], vecs[5:6]

    tb, cp = x.shape

    if pow2_groups:
        # Butterfly segment-all-reduce: groups are contiguous, gs-aligned lane
        # ranges with gs a power of two, so the partner of lane i at step s is
        # i XOR s (never leaves the group).  log2(gs) steps of 2 XLU rolls +
        # VPU select/add; reduces and broadcasts in one pass, no MXU, pure f32.
        shifts = []
        s = 1
        while s < gs:
            shifts.append(s)
            s *= 2
        lane = jax.lax.broadcasted_iota(jnp.int32, (tb, cp), 1)
        masks = tuple((lane & s) == 0 for s in shifts)   # hoisted: shared by all reduces

        def group_mean(v):
            for s, m in zip(shifts, masks):
                # np.roll semantics: roll(v, cp - s)[i] == v[(i + s) % cp].
                v = v + jnp.where(m, pltpu.roll(v, cp - s, axis=1),
                                  pltpu.roll(v, s, axis=1))
            return v * (1.0 / gs)

        def group_norm(h, gamma, beta):
            mean = group_mean(h)                   # per-group mean, already broadcast
            d = h - mean
            var = group_mean(d * d)                # biased var (two-pass: robust)
            return d * jax.lax.rsqrt(var + eps) * gamma + beta
    else:
        # Fallback (non-power-of-two group size): dense f32 averaging projector.
        def group_norm(h, gamma, beta):
            mean = jnp.dot(h, proj, preferred_element_type=jnp.float32)
            d = h - mean
            var = jnp.dot(d * d, proj, preferred_element_type=jnp.float32)
            return d * jax.lax.rsqrt(var + eps) * gamma + beta

    def silu(h):                                   # sigmoid goes to the EUP slot
        return h * jax.nn.sigmoid(h)

    # norm1 -> act1 -> mlp1   (bf16 MXU operands, f32 accumulation)
    h = silu(group_norm(x, gamma1, beta1))
    h = jnp.dot(h.astype(jnp.bfloat16), w1_ref[...],
                preferred_element_type=jnp.float32) + b1

    # norm2 -> act2 -> dropout(eval-mode identity) -> mlp2
    h = silu(group_norm(h, gamma2, beta2))
    # TODO(synk): train-mode dropout would need pltpu.prng_seed / prng_random_bits.
    h = jnp.dot(h.astype(jnp.bfloat16), w2_ref[...],
                preferred_element_type=jnp.float32) + b2

    # residual (shortcut = Identity since in_channels == out_channels)
    out_ref[...] = (h + x).astype(out_ref.dtype)


def _tpu_defaults():
    """(lane_pack_target, vmem_budget_bytes) for the local TPU generation."""
    lane_target, vmem_budget = 128, 48 << 20           # conservative / v7x-safe defaults
    try:
        cap = pltpu.get_tpu_info().vmem_capacity_bytes
        if cap:
            vmem_budget = int(cap) * 3 // 4            # ~96 MiB v5e/v6e, ~48 MiB v7x
    except Exception:
        pass
    try:
        kind = jax.devices()[0].device_kind.lower()
        # v6e / v7x MXUs are 2x256x256 -> pack to 256 lanes; v2-v5 stay at 128.
        if not any(old in kind for old in ("v2", "v3", "v4", "v5")):
            lane_target = 256
    except Exception:
        pass
    return lane_target, vmem_budget


def mlp_res_block(x, params, *, n_groups, block_b=None, eps=1e-5):
    """x: (B, C) float32 or bfloat16.  params: dict from init_params (W as (in, out))."""
    b, c = x.shape
    assert c % n_groups == 0
    gs = c // n_groups
    pow2_groups = (gs & (gs - 1)) == 0

    lane_target, vmem_budget = _tpu_defaults()

    # ---- lane packing: fold `pack` batch rows into one lane-dense row ----
    pack = 1
    if c < lane_target and lane_target % c == 0:
        pack = lane_target // c
    cp = c * pack
    bp = -(-b // pack)                        # packed rows; ragged B is zero-padded
    if bp * pack != b:
        x = jnp.concatenate([x, jnp.zeros((bp * pack - b, c), x.dtype)], axis=0)
    xp = x.reshape(bp, cp)

    # ---- parameter packing (done once in the wrapper, outside the kernel) ----
    tile = lambda v: jnp.tile(v.astype(jnp.float32).reshape(1, c), (1, pack))
    vecs = jnp.concatenate(
        [tile(params["gamma1"]), tile(params["beta1"]), tile(params["b1"]),
         tile(params["gamma2"]), tile(params["beta2"]), tile(params["b2"]),
         jnp.zeros((2, cp), jnp.float32)], axis=0)                     # (8, Cp)

    # Block-diagonal (in, out) weights, bf16 for the MXU.
    eye = jnp.eye(pack, dtype=jnp.float32)
    w1 = jnp.kron(eye, params["w1"].astype(jnp.float32)).astype(jnp.bfloat16)
    w2 = jnp.kron(eye, params["w2"].astype(jnp.float32)).astype(jnp.bfloat16)

    extra_inputs, extra_shapes = [], []
    if not pow2_groups:
        # Dense averaging projector fallback: proj[i, j] = 1/gs iff same group.
        idx = jnp.arange(cp)
        proj = ((idx[:, None] // gs) == (idx[None, :] // gs)).astype(jnp.float32) / gs
        extra_inputs, extra_shapes = [proj], [(cp, cp)]

    # ---- batch tiling ----
    if block_b is None:
        block_b = min(bp, 4096)               # big tile amortizes ~600-cycle step cost
        if bp > 256:                          # >= 2 steps so both v7x TCs get work
            block_b = min(block_b, -(-bp // 2))

    # Shrink the tile until double-buffered tiles + constants + temporaries fit VMEM.
    itemsize = jnp.dtype(x.dtype).itemsize
    const_bytes = 8 * cp * 4 + 2 * cp * cp * 2 + (cp * cp * 4 if not pow2_groups else 0)

    def vmem_need(tb):
        return (2 * 2 * tb * cp * itemsize    # in + out tiles, double-buffered
                + 2 * const_bytes             # conservative: assume 2 const buffers
                + 6 * tb * cp * 4             # live f32 temporaries
                + (2 << 20))                  # compiler slack

    while block_b > 8 and vmem_need(block_b) > vmem_budget:
        block_b //= 2
    if block_b >= bp:
        block_b = bp                          # single step: full-dim block is legal
    else:
        block_b = -(-block_b // 8) * 8        # multi-step: sublane-aligned tiles
    bp_pad = -(-bp // block_b) * block_b
    if bp_pad != bp:
        xp = jnp.concatenate([xp, jnp.zeros((bp_pad - bp, cp), xp.dtype)], axis=0)
    grid = (bp_pad // block_b,)
    vmem_limit = int(min(max(vmem_need(block_b), 16 << 20), vmem_budget))

    tile_spec = pl.BlockSpec((block_b, cp), lambda i: (i, 0))
    kernel = functools.partial(_mlp_res_block_kernel, gs=gs, eps=eps,
                               pow2_groups=pow2_groups)

    def call(single_buffer_consts):
        if single_buffer_consts:
            # Constant index_map -> single-buffer to halve the constants' VMEM.
            const_spec = lambda shape: pl.BlockSpec(shape, lambda i: (0, 0),
                                                    pipeline_mode=pl.Buffered(1))
        else:
            const_spec = lambda shape: pl.BlockSpec(shape, lambda i: (0, 0))
        in_specs = ([tile_spec, const_spec((8, cp))]
                    + [const_spec(s) for s in extra_shapes]
                    + [const_spec((cp, cp)), const_spec((cp, cp))])
        return pl.pallas_call(
            kernel,
            out_shape=jax.ShapeDtypeStruct((bp_pad, cp), x.dtype),
            grid_spec=pltpu.PrefetchScalarGridSpec(
                num_scalar_prefetch=0,
                grid=grid,
                in_specs=in_specs,
                out_specs=tile_spec,
            ),
            compiler_params=pltpu.CompilerParams(
                dimension_semantics=("parallel",),   # batch axis shards across 2 TCs
                vmem_limit_bytes=vmem_limit),
        )(xp, vecs, *extra_inputs, w1, w2)

    try:
        out = call(single_buffer_consts=True)
    except Exception:
        # Fallback for jax versions that reject pipeline_mode=pl.Buffered(1):
        # constants are just double-buffered (2x their VMEM, no other effect).
        out = call(single_buffer_consts=False)

    return out[:bp].reshape(bp * pack, c)[:b]


def init_params(key, c, *, zero_mlp2=True):
    """Parameters matching the module's shapes (Linear weights stored as (in, out))."""
    ks = jax.random.split(key, 8)
    params = {
        "gamma1": (1.0 + 0.1 * jax.random.normal(ks[0], (1, c))).astype(jnp.float32),
        "beta1": (0.1 * jax.random.normal(ks[1], (1, c))).astype(jnp.float32),
        "gamma2": (1.0 + 0.1 * jax.random.normal(ks[2], (1, c))).astype(jnp.float32),
        "beta2": (0.1 * jax.random.normal(ks[3], (1, c))).astype(jnp.float32),
        "w1": (0.05 * jax.random.normal(ks[4], (c, c))).astype(jnp.float32),
        "b1": (0.05 * jax.random.normal(ks[5], (1, c))).astype(jnp.float32),
    }
    if zero_mlp2:
        # Matches MLPResBlock.__init__: mlp2 weight/bias zero-initialized.
        params["w2"] = jnp.zeros((c, c), jnp.float32)
        params["b2"] = jnp.zeros((1, c), jnp.float32)
    else:
        # Non-zero mlp2 so the test numerically exercises the second GN/SiLU/matmul.
        params["w2"] = (0.05 * jax.random.normal(ks[6], (c, c))).astype(jnp.float32)
        params["b2"] = (0.05 * jax.random.normal(ks[7], (1, c))).astype(jnp.float32)
    return params


def reference_forward(x, params, n_groups, eps=1e-5):
    """Pure-JAX f32 reference mirroring the PyTorch forward (eval mode)."""
    def gn(h, g, bb):
        bsz, c = h.shape
        hg = h.reshape(bsz, n_groups, c // n_groups)
        mean = hg.mean(-1, keepdims=True)
        var = ((hg - mean) ** 2).mean(-1, keepdims=True)
        hn = ((hg - mean) / jnp.sqrt(var + eps)).reshape(bsz, c)
        return hn * g + bb

    silu = lambda v: v * jax.nn.sigmoid(v)
    h = silu(gn(x, params["gamma1"], params["beta1"]))
    h = h @ params["w1"] + params["b1"]
    h = silu(gn(h, params["gamma2"], params["beta2"]))
    h = h @ params["w2"] + params["b2"]
    return h + x


if __name__ == "__main__":
    B, C, N_GROUPS = 16, 64, 32          # in_channels == out_channels == 64, gs == 2
    key = jax.random.PRNGKey(0)
    kx, kp = jax.random.split(key)
    x = jax.random.normal(kx, (B, C), dtype=jnp.float32)

    # bf16 MXU operands (f32 accumulation) -> compare against the f32 reference
    # with a tolerance sized for bf16 matmul rounding.
    TOL = dict(atol=2e-2, rtol=2e-2)

    # 1) Module-faithful init (mlp2 zero-initialized, as in __init__).
    params0 = init_params(kp, C, zero_mlp2=True)
    out0 = jax.block_until_ready(mlp_res_block(x, params0, n_groups=N_GROUPS))
    ref0 = reference_forward(x, params0, N_GROUPS)
    assert out0.shape == (B, C)
    assert jnp.allclose(out0, ref0, **TOL), "mismatch vs reference (zero mlp2)"

    # 2) Non-zero mlp2 so the second matmul / GN path is actually validated.
    params1 = init_params(kp, C, zero_mlp2=False)
    out1 = jax.block_until_ready(mlp_res_block(x, params1, n_groups=N_GROUPS))
    ref1 = reference_forward(x, params1, N_GROUPS)
    assert jnp.allclose(out1, ref1, **TOL), "mismatch vs reference (non-zero mlp2)"

    # 3) Ragged batch exercises the zero-padding path (B not divisible by pack).
    x13 = x[:13]
    out2 = jax.block_until_ready(mlp_res_block(x13, params1, n_groups=N_GROUPS))
    ref2 = reference_forward(x13, params1, N_GROUPS)
    assert out2.shape == (13, C)
    assert jnp.allclose(out2, ref2, **TOL), "mismatch vs reference (ragged batch)"

    print("KERNEL_OK")
</pallas_src>

<mosaic_0001>
module attributes {stable_mosaic.version = 11 : i64} {
  func.func @_mlp_res_block_kernel(%arg0: i32, %arg1: memref<4x256xf32, #tpu.memory_space<vmem>>, %arg2: memref<8x256xf32, #tpu.memory_space<vmem>>, %arg3: memref<256x256xbf16, #tpu.memory_space<vmem>>, %arg4: memref<256x256xbf16, #tpu.memory_space<vmem>>, %arg5: memref<4x256xf32, #tpu.memory_space<vmem>>) attributes {dimension_semantics = [#tpu.dimension_semantics<parallel>], iteration_bounds = array<i64: 1>, scalar_prefetch = 0 : i64, scratch_operands = 0 : i64, tpu.core_type = #tpu.core_type<tc>, window_params = [{transform_indices = @transform_0, window_bounds = array<i64: 4, 256>}, {pipeline_mode = #tpu.pipeline_mode<synchronous>, transform_indices = @transform_1, window_bounds = array<i64: 8, 256>}, {pipeline_mode = #tpu.pipeline_mode<synchronous>, transform_indices = @transform_2, window_bounds = array<i64: 256, 256>}, {pipeline_mode = #tpu.pipeline_mode<synchronous>, transform_indices = @transform_3, window_bounds = array<i64: 256, 256>}, {transform_indices = @transform_4, window_bounds = array<i64: 4, 256>}]} {
    %c0 = arith.constant 0 : index
    %c0_0 = arith.constant 0 : index
    %0 = vector.load %arg1[%c0, %c0_0] : memref<4x256xf32, #tpu.memory_space<vmem>>, vector<4x256xf32>
    %c0_1 = arith.constant 0 : index
    %c0_2 = arith.constant 0 : index
    %1 = vector.load %arg2[%c0_1, %c0_2] : memref<8x256xf32, #tpu.memory_space<vmem>>, vector<8x256xf32>
    %2 = vector.extract_strided_slice %1 {offsets = [0, 0], sizes = [1, 256], strides = [1, 1]} : vector<8x256xf32> to vector<1x256xf32>
    %3 = vector.extract_strided_slice %1 {offsets = [1, 0], sizes = [1, 256], strides = [1, 1]} : vector<8x256xf32> to vector<1x256xf32>
    %4 = vector.extract_strided_slice %1 {offsets = [2, 0], sizes = [1, 256], strides = [1, 1]} : vector<8x256xf32> to vector<1x256xf32>
    %5 = vector.extract_strided_slice %1 {offsets = [3, 0], sizes = [1, 256], strides = [1, 1]} : vector<8x256xf32> to vector<1x256xf32>
    %6 = vector.extract_strided_slice %1 {offsets = [4, 0], sizes = [1, 256], strides = [1, 1]} : vector<8x256xf32> to vector<1x256xf32>
    %7 = vector.extract_strided_slice %1 {offsets = [5, 0], sizes = [1, 256], strides = [1, 1]} : vector<8x256xf32> to vector<1x256xf32>
    %8 = tpu.iota {dimensions = array<i32: 1>} : vector<4x256xi32>
    %c1_i32 = arith.constant 1 : i32
    %9 = vector.broadcast %c1_i32 : i32 to vector<4x256xi32>
    %10 = arith.andi %8, %9 : vector<4x256xi32>
    %c0_i32 = arith.constant 0 : i32
    %11 = vector.broadcast %c0_i32 : i32 to vector<4x256xi32>
    %12 = arith.cmpi eq, %10, %11 : vector<4x256xi32>
    %c255_i32 = arith.constant 255 : i32
    %13 = tpu.dynamic_rotate %0 by %c255_i32 dim 1 : vector<4x256xf32>, i32 -> vector<4x256xf32>
    %c1_i32_3 = arith.constant 1 : i32
    %14 = tpu.dynamic_rotate %0 by %c1_i32_3 dim 1 : vector<4x256xf32>, i32 -> vector<4x256xf32>
    %15 = arith.select %12, %13, %14 : vector<4x256xi1>, vector<4x256xf32>
    %16 = arith.addf %0, %15 : vector<4x256xf32>
    %cst = arith.constant 5.000000e-01 : f32
    %17 = vector.broadcast %cst : f32 to vector<4x256xf32>
    %18 = arith.mulf %16, %17 : vector<4x256xf32>
    %19 = arith.subf %0, %18 : vector<4x256xf32>
    %20 = arith.mulf %19, %19 : vector<4x256xf32>
    %c255_i32_4 = arith.constant 255 : i32
    %21 = tpu.dynamic_rotate %20 by %c255_i32_4 dim 1 : vector<4x256xf32>, i32 -> vector<4x256xf32>
    %c1_i32_5 = arith.constant 1 : i32
    %22 = tpu.dynamic_rotate %20 by %c1_i32_5 dim 1 : vector<4x256xf32>, i32 -> vector<4x256xf32>
    %23 = arith.select %12, %21, %22 : vector<4x256xi1>, vector<4x256xf32>
    %24 = arith.addf %20, %23 : vector<4x256xf32>
    %cst_6 = arith.constant 5.000000e-01 : f32
    %25 = vector.broadcast %cst_6 : f32 to vector<4x256xf32>
    %26 = arith.mulf %24, %25 : vector<4x256xf32>
    %cst_7 = arith.constant 9.99999974E-6 : f32
    %27 = vector.broadcast %cst_7 : f32 to vector<4x256xf32>
    %28 = arith.addf %26, %27 : vector<4x256xf32>
    %29 = math.rsqrt %28 : vector<4x256xf32>
    %30 = arith.mulf %19, %29 : vector<4x256xf32>
    %31 = vector.broadcast %2 : vector<1x256xf32> to vector<4x256xf32>
    %32 = arith.mulf %30, %31 : vector<4x256xf32>
    %33 = vector.broadcast %3 : vector<1x256xf32> to vector<4x256xf32>
    %34 = arith.addf %32, %33 : vector<4x256xf32>
    %35 = arith.negf %34 : vector<4x256xf32>
    %36 = math.exp %35 : vector<4x256xf32>
    %cst_8 = arith.constant 1.000000e+00 : f32
    %37 = vector.broadcast %cst_8 : f32 to vector<4x256xf32>
    %38 = arith.addf %37, %36 : vector<4x256xf32>
    %39 = arith.divf %37, %38 : vector<4x256xf32>
    %40 = arith.mulf %34, %39 : vector<4x256xf32>
    %41 = arith.truncf %40 : vector<4x256xf32> to vector<4x256xbf16>
    %c0_9 = arith.constant 0 : index
    %c0_10 = arith.constant 0 : index
    %42 = vector.load %arg3[%c0_9, %c0_10] : memref<256x256xbf16, #tpu.memory_space<vmem>>, vector<256x256xbf16>
    %cst_11 = arith.constant dense<0.000000e+00> : vector<4x256xf32>
    %43 = tpu.matmul %41, %42, %cst_11 {dimension_numbers = #tpu.dot_dimension_numbers<[1], [0], [0], [1], [0, 0, 1, 1], [], []>} : vector<4x256xbf16>, vector<256x256xbf16>, vector<4x256xf32> -> vector<4x256xf32>
    %44 = vector.broadcast %4 : vector<1x256xf32> to vector<4x256xf32>
    %45 = arith.addf %43, %44 : vector<4x256xf32>
    %c255_i32_12 = arith.constant 255 : i32
    %46 = tpu.dynamic_rotate %45 by %c255_i32_12 dim 1 : vector<4x256xf32>, i32 -> vector<4x256xf32>
    %c1_i32_13 = arith.constant 1 : i32
    %47 = tpu.dynamic_rotate %45 by %c1_i32_13 dim 1 : vector<4x256xf32>, i32 -> vector<4x256xf32>
    %48 = arith.select %12, %46, %47 : vector<4x256xi1>, vector<4x256xf32>
    %49 = arith.addf %45, %48 : vector<4x256xf32>
    %cst_14 = arith.constant 5.000000e-01 : f32
    %50 = vector.broadcast %cst_14 : f32 to vector<4x256xf32>
    %51 = arith.mulf %49, %50 : vector<4x256xf32>
    %52 = arith.subf %45, %51 : vector<4x256xf32>
    %53 = arith.mulf %52, %52 : vector<4x256xf32>
    %c255_i32_15 = arith.constant 255 : i32
    %54 = tpu.dynamic_rotate %53 by %c255_i32_15 dim 1 : vector<4x256xf32>, i32 -> vector<4x256xf32>
    %c1_i32_16 = arith.constant 1 : i32
    %55 = tpu.dynamic_rotate %53 by %c1_i32_16 dim 1 : vector<4x256xf32>, i32 -> vector<4x256xf32>
    %56 = arith.select %12, %54, %55 : vector<4x256xi1>, vector<4x256xf32>
    %57 = arith.addf %53, %56 : vector<4x256xf32>
    %cst_17 = arith.constant 5.000000e-01 : f32
    %58 = vector.broadcast %cst_17 : f32 to vector<4x256xf32>
    %59 = arith.mulf %57, %58 : vector<4x256xf32>
    %cst_18 = arith.constant 9.99999974E-6 : f32
    %60 = vector.broadcast %cst_18 : f32 to vector<4x256xf32>
    %61 = arith.addf %59, %60 : vector<4x256xf32>
    %62 = math.rsqrt %61 : vector<4x256xf32>
    %63 = arith.mulf %52, %62 : vector<4x256xf32>
    %64 = vector.broadcast %5 : vector<1x256xf32> to vector<4x256xf32>
    %65 = arith.mulf %63, %64 : vector<4x256xf32>
    %66 = vector.broadcast %6 : vector<1x256xf32> to vector<4x256xf32>
    %67 = arith.addf %65, %66 : vector<4x256xf32>
    %68 = arith.negf %67 : vector<4x256xf32>
    %69 = math.exp %68 : vector<4x256xf32>
    %cst_19 = arith.constant 1.000000e+00 : f32
    %70 = vector.broadcast %cst_19 : f32 to vector<4x256xf32>
    %71 = arith.addf %70, %69 : vector<4x256xf32>
    %72 = arith.divf %70, %71 : vector<4x256xf32>
    %73 = arith.mulf %67, %72 : vector<4x256xf32>
    %74 = arith.truncf %73 : vector<4x256xf32> to vector<4x256xbf16>
    %c0_20 = arith.constant 0 : index
    %c0_21 = arith.constant 0 : index
    %75 = vector.load %arg4[%c0_20, %c0_21] : memref<256x256xbf16, #tpu.memory_space<vmem>>, vector<256x256xbf16>
    %cst_22 = arith.constant dense<0.000000e+00> : vector<4x256xf32>
    %76 = tpu.matmul %74, %75, %cst_22 {dimension_numbers = #tpu.dot_dimension_numbers<[1], [0], [0], [1], [0, 0, 1, 1], [], []>} : vector<4x256xbf16>, vector<256x256xbf16>, vector<4x256xf32> -> vector<4x256xf32>
    %77 = vector.broadcast %7 : vector<1x256xf32> to vector<4x256xf32>
    %78 = arith.addf %76, %77 : vector<4x256xf32>
    %79 = arith.addf %78, %0 : vector<4x256xf32>
    %c0_23 = arith.constant 0 : index
    %c0_24 = arith.constant 0 : index
    %80 = vector.load %arg5[%c0_23, %c0_24] : memref<4x256xf32, #tpu.memory_space<vmem>>, vector<4x256xf32>
    tpu.vector_store %arg5[%c0_23, %c0_24], %79 {strides = array<i32>} : memref<4x256xf32, #tpu.memory_space<vmem>>, vector<4x256xf32>,
    return
  }
  func.func @transform_0(%arg0: i32) -> (i32, i32) {
    %c0_i32 = arith.constant 0 : i32
    %c0_i32_0 = arith.constant 0 : i32
    return %arg0, %c0_i32 : i32, i32
  }
  func.func @transform_1(%arg0: i32) -> (i32, i32) {
    %c0_i32 = arith.constant 0 : i32
    %c0_i32_0 = arith.constant 0 : i32
    %c0_i32_1 = arith.constant 0 : i32
    return %c0_i32, %c0_i32_0 : i32, i32
  }
  func.func @transform_2(%arg0: i32) -> (i32, i32) {
    %c0_i32 = arith.constant 0 : i32
    %c0_i32_0 = arith.constant 0 : i32
    %c0_i32_1 = arith.constant 0 : i32
    return %c0_i32, %c0_i32_0 : i32, i32
  }
  func.func @transform_3(%arg0: i32) -> (i32, i32) {
    %c0_i32 = arith.constant 0 : i32
    %c0_i32_0 = arith.constant 0 : i32
    %c0_i32_1 = arith.constant 0 : i32
    return %c0_i32, %c0_i32_0 : i32, i32
  }
  func.func @transform_4(%arg0: i32) -> (i32, i32) {
    %c0_i32 = arith.constant 0 : i32
    %c0_i32_0 = arith.constant 0 : i32
    return %arg0, %c0_i32 : i32, i32
  }
}

module attributes {stable_mosaic.version = 11 : i64} {
  func.func @_mlp_res_block_kernel(%arg0: i32, %arg1: memref<4x256xf32, #tpu.memory_space<vmem>>, %arg2: memref<8x256xf32, #tpu.memory_space<vmem>>, %arg3: memref<256x256xbf16, #tpu.memory_space<vmem>>, %arg4: memref<256x256xbf16, #tpu.memory_space<vmem>>, %arg5: memref<4x256xf32, #tpu.memory_space<vmem>>) attributes {dimension_semantics = [#tpu.dimension_semantics<parallel>], iteration_bounds = array<i64: 1>, scalar_prefetch = 0 : i64, scratch_operands = 0 : i64, tpu.core_type = #tpu.core_type<tc>, window_params = [{transform_indices = @transform_0, window_bounds = array<i64: 4, 256>}, {pipeline_mode = #tpu.pipeline_mode<synchronous>, transform_indices = @transform_1, window_bounds = array<i64: 8, 256>}, {pipeline_mode = #tpu.pipeline_mode<synchronous>, transform_indices = @transform_2, window_bounds = array<i64: 256, 256>}, {pipeline_mode = #tpu.pipeline_mode<synchronous>, transform_indices = @transform_3, window_bounds = array<i64: 256, 256>}, {transform_indices = @transform_4, window_bounds = array<i64: 4, 256>}]} {
    %c0 = arith.constant 0 : index
    %c0_0 = arith.constant 0 : index
    %0 = vector.load %arg1[%c0, %c0_0] : memref<4x256xf32, #tpu.memory_space<vmem>>, vector<4x256xf32>
    %c0_1 = arith.constant 0 : index
    %c0_2 = arith.constant 0 : index
    %1 = vector.load %arg2[%c0_1, %c0_2] : memref<8x256xf32, #tpu.memory_space<vmem>>, vector<8x256xf32>
    %2 = vector.extract_strided_slice %1 {offsets = [0, 0], sizes = [1, 256], strides = [1, 1]} : vector<8x256xf32> to vector<1x256xf32>
    %3 = vector.extract_strided_slice %1 {offsets = [1, 0], sizes = [1, 256], strides = [1, 1]} : vector<8x256xf32> to vector<1x256xf32>
    %4 = vector.extract_strided_slice %1 {offsets = [2, 0], sizes = [1, 256], strides = [1, 1]} : vector<8x256xf32> to vector<1x256xf32>
    %5 = vector.extract_strided_slice %1 {offsets = [3, 0], sizes = [1, 256], strides = [1, 1]} : vector<8x256xf32> to vector<1x256xf32>
    %6 = vector.extract_strided_slice %1 {offsets = [4, 0], sizes = [1, 256], strides = [1, 1]} : vector<8x256xf32> to vector<1x256xf32>
    %7 = vector.extract_strided_slice %1 {offsets = [5, 0], sizes = [1, 256], strides = [1, 1]} : vector<8x256xf32> to vector<1x256xf32>
    %8 = tpu.iota {dimensions = array<i32: 1>} : vector<4x256xi32>
    %c1_i32 = arith.constant 1 : i32
    %9 = vector.broadcast %c1_i32 : i32 to vector<4x256xi32>
    %10 = arith.andi %8, %9 : vector<4x256xi32>
    %c0_i32 = arith.constant 0 : i32
    %11 = vector.broadcast %c0_i32 : i32 to vector<4x256xi32>
    %12 = arith.cmpi eq, %10, %11 : vector<4x256xi32>
    %c255_i32 = arith.constant 255 : i32
    %13 = tpu.dynamic_rotate %0 by %c255_i32 dim 1 : vector<4x256xf32>, i32 -> vector<4x256xf32>
    %c1_i32_3 = arith.constant 1 : i32
    %14 = tpu.dynamic_rotate %0 by %c1_i32_3 dim 1 : vector<4x256xf32>, i32 -> vector<4x256xf32>
    %15 = arith.select %12, %13, %14 : vector<4x256xi1>, vector<4x256xf32>
    %16 = arith.addf %0, %15 : vector<4x256xf32>
    %cst = arith.constant 5.000000e-01 : f32
    %17 = vector.broadcast %cst : f32 to vector<4x256xf32>
    %18 = arith.mulf %16, %17 : vector<4x256xf32>
    %19 = arith.subf %0, %18 : vector<4x256xf32>
    %20 = arith.mulf %19, %19 : vector<4x256xf32>
    %c255_i32_4 = arith.constant 255 : i32
    %21 = tpu.dynamic_rotate %20 by %c255_i32_4 dim 1 : vector<4x256xf32>, i32 -> vector<4x256xf32>
    %c1_i32_5 = arith.constant 1 : i32
    %22 = tpu.dynamic_rotate %20 by %c1_i32_5 dim 1 : vector<4x256xf32>, i32 -> vector<4x256xf32>
    %23 = arith.select %12, %21, %22 : vector<4x256xi1>, vector<4x256xf32>
    %24 = arith.addf %20, %23 : vector<4x256xf32>
    %cst_6 = arith.constant 5.000000e-01 : f32
    %25 = vector.broadcast %cst_6 : f32 to vector<4x256xf32>
    %26 = arith.mulf %24, %25 : vector<4x256xf32>
    %cst_7 = arith.constant 9.99999974E-6 : f32
    %27 = vector.broadcast %cst_7 : f32 to vector<4x256xf32>
    %28 = arith.addf %26, %27 : vector<4x256xf32>
    %29 = math.rsqrt %28 : vector<4x256xf32>
    %30 = arith.mulf %19, %29 : vector<4x256xf32>
    %31 = vector.broadcast %2 : vector<1x256xf32> to vector<4x256xf32>
    %32 = arith.mulf %30, %31 : vector<4x256xf32>
    %33 = vector.broadcast %3 : vector<1x256xf32> to vector<4x256xf32>
    %34 = arith.addf %32, %33 : vector<4x256xf32>
    %35 = arith.negf %34 : vector<4x256xf32>
    %36 = math.exp %35 : vector<4x256xf32>
    %cst_8 = arith.constant 1.000000e+00 : f32
    %37 = vector.broadcast %cst_8 : f32 to vector<4x256xf32>
    %38 = arith.addf %37, %36 : vector<4x256xf32>
    %39 = arith.divf %37, %38 : vector<4x256xf32>
    %40 = arith.mulf %34, %39 : vector<4x256xf32>
    %41 = arith.truncf %40 : vector<4x256xf32> to vector<4x256xbf16>
    %c0_9 = arith.constant 0 : index
    %c0_10 = arith.constant 0 : index
    %42 = vector.load %arg3[%c0_9, %c0_10] : memref<256x256xbf16, #tpu.memory_space<vmem>>, vector<256x256xbf16>
    %cst_11 = arith.constant dense<0.000000e+00> : vector<4x256xf32>
    %43 = tpu.matmul %41, %42, %cst_11 {dimension_numbers = #tpu.dot_dimension_numbers<[1], [0], [0], [1], [0, 0, 1, 1], [], []>} : vector<4x256xbf16>, vector<256x256xbf16>, vector<4x256xf32> -> vector<4x256xf32>
    %44 = vector.broadcast %4 : vector<1x256xf32> to vector<4x256xf32>
    %45 = arith.addf %43, %44 : vector<4x256xf32>
    %c255_i32_12 = arith.constant 255 : i32
    %46 = tpu.dynamic_rotate %45 by %c255_i32_12 dim 1 : vector<4x256xf32>, i32 -> vector<4x256xf32>
    %c1_i32_13 = arith.constant 1 : i32
    %47 = tpu.dynamic_rotate %45 by %c1_i32_13 dim 1 : vector<4x256xf32>, i32 -> vector<4x256xf32>
    %48 = arith.select %12, %46, %47 : vector<4x256xi1>, vector<4x256xf32>
    %49 = arith.addf %45, %48 : vector<4x256xf32>
    %cst_14 = arith.constant 5.000000e-01 : f32
    %50 = vector.broadcast %cst_14 : f32 to vector<4x256xf32>
    %51 = arith.mulf %49, %50 : vector<4x256xf32>
    %52 = arith.subf %45, %51 : vector<4x256xf32>
    %53 = arith.mulf %52, %52 : vector<4x256xf32>
    %c255_i32_15 = arith.constant 255 : i32
    %54 = tpu.dynamic_rotate %53 by %c255_i32_15 dim 1 : vector<4x256xf32>, i32 -> vector<4x256xf32>
    %c1_i32_16 = arith.constant 1 : i32
    %55 = tpu.dynamic_rotate %53 by %c1_i32_16 dim 1 : vector<4x256xf32>, i32 -> vector<4x256xf32>
    %56 = arith.select %12, %54, %55 : vector<4x256xi1>, vector<4x256xf32>
    %57 = arith.addf %53, %56 : vector<4x256xf32>
    %cst_17 = arith.constant 5.000000e-01 : f32
    %58 = vector.broadcast %cst_17 : f32 to vector<4x256xf32>
    %59 = arith.mulf %57, %58 : vector<4x256xf32>
    %cst_18 = arith.constant 9.99999974E-6 : f32
    %60 = vector.broadcast %cst_18 : f32 to vector<4x256xf32>
    %61 = arith.addf %59, %60 : vector<4x256xf32>
    %62 = math.rsqrt %61 : vector<4x256xf32>
    %63 = arith.mulf %52, %62 : vector<4x256xf32>
    %64 = vector.broadcast %5 : vector<1x256xf32> to vector<4x256xf32>
    %65 = arith.mulf %63, %64 : vector<4x256xf32>
    %66 = vector.broadcast %6 : vector<1x256xf32> to vector<4x256xf32>
    %67 = arith.addf %65, %66 : vector<4x256xf32>
    %68 = arith.negf %67 : vector<4x256xf32>
    %69 = math.exp %68 : vector<4x256xf32>
    %cst_19 = arith.constant 1.000000e+00 : f32
    %70 = vector.broadcast %cst_19 : f32 to vector<4x256xf32>
    %71 = arith.addf %70, %69 : vector<4x256xf32>
    %72 = arith.divf %70, %71 : vector<4x256xf32>
    %73 = arith.mulf %67, %72 : vector<4x256xf32>
    %74 = arith.truncf %73 : vector<4x256xf32> to vector<4x256xbf16>
    %c0_20 = arith.constant 0 : index
    %c0_21 = arith.constant 0 : index
    %75 = vector.load %arg4[%c0_20, %c0_21] : memref<256x256xbf16, #tpu.memory_space<vmem>>, vector<256x256xbf16>
    %cst_22 = arith.constant dense<0.000000e+00> : vector<4x256xf32>
    %76 = tpu.matmul %74, %75, %cst_22 {dimension_numbers = #tpu.dot_dimension_numbers<[1], [0], [0], [1], [0, 0, 1, 1], [], []>} : vector<4x256xbf16>, vector<256x256xbf16>, vector<4x256xf32> -> vector<4x256xf32>
    %77 = vector.broadcast %7 : vector<1x256xf32> to vector<4x256xf32>
    %78 = arith.addf %76, %77 : vector<4x256xf32>
    %79 = arith.addf %78, %0 : vector<4x256xf32>
    %c0_23 = arith.constant 0 : index
    %c0_24 = arith.constant 0 : index
    %80 = vector.load %arg5[%c0_23, %c0_24] : memref<4x256xf32, #tpu.memory_space<vmem>>, vector<4x256xf32>
    tpu.vector_store %arg5[%c0_23, %c0_24], %79 {strides = array<i32>} : memref<4x256xf32, #tpu.memory_space<vmem>>, vector<4x256xf32>,
    return
  }
  func.func @transform_0(%arg0: i32) -> (i32, i32) {
    %c0_i32 = arith.constant 0 : i32
    %c0_i32_0 = arith.constant 0 : i32
    return %arg0, %c0_i32 : i32, i32
  }
  func.func @transform_1(%arg0: i32) -> (i32, i32) {
    %c0_i32 = arith.constant 0 : i32
    %c0_i32_0 = arith.constant 0 : i32
    %c0_i32_1 = arith.constant 0 : i32
    return %c0_i32, %c0_i32_0 : i32, i32
  }
  func.func @transform_2(%arg0: i32) -> (i32, i32) {
    %c0_i32 = arith.constant 0 : i32
    %c0_i32_0 = arith.constant 0 : i32
    %c0_i32_1 = arith.constant 0 : i32
    return %c0_i32, %c0_i32_0 : i32, i32
  }
  func.func @transform_3(%arg0: i32) -> (i32, i32) {
    %c0_i32 = arith.constant 0 : i32
    %c0_i32_0 = arith.constant 0 : i32
    %c0_i32_1 = arith.constant 0 : i32
    return %c0_i32, %c0_i32_0 : i32, i32
  }
  func.func @transform_4(%arg0: i32) -> (i32, i32) {
    %c0_i32 = arith.constant 0 : i32
    %c0_i32_0 = arith.constant 0 : i32
    return %arg0, %c0_i32 : i32, i32
  }
}

</mosaic_0001>

<llo_original>
// kernel: tpu_custom_call.1
$region0: #{tpu_custom_call.1}
  #allocation0 [shape = 'u32[]', space=smem, size = 0x4, offset = 0x4, fixed_abs, tag = 'smem constant byte address 0x4 - core index']
  #allocation1 [shape = 'u32[144,128]{1,0:T(1,128)}', space=vmem, size = 0x12000, scoped, tag = 'internal scratch']
  %s0 = inlined_call_operand.hbm [shape: f32[4,256], index: 0, kind: input, shape index: {}]
  %s1 = inlined_call_operand.hbm [shape: f32[8,256], index: 1, kind: input, shape index: {}]
  %s2 = inlined_call_operand.hbm [shape: bf16[256,256], index: 2, kind: input, shape index: {}]
  %s3 = inlined_call_operand.hbm [shape: bf16[256,256], index: 3, kind: input, shape index: {}]
  %s4 = inlined_call_operand.hbm [shape: f32[4,256], index: 4, kind: output, shape index: {}]
  %s5 = sld [smem:[#allocation0]]
  $region42: #{tpu_custom_call.1} parent=0
    _
  %s7 = ssub.s32 1, %s5
  %s8 = scalar_select 0, %s7, %s5
  $region1: #{tpu_custom_call.1} parent=0
    #allocation2 [shape = 'u8[4096]{0}', space=vmem, size = 0x1000, scoped, tag = 'input window, operand 0, single buffered']
    #allocation3 [shape = 's32[1]{0}', space=sflag, size = 0x4, scoped, tag = 'scoped memory for tpu_custom_call.1']
    #allocation4 [shape = 's32[1]{0}', space=sflag, size = 0x4, scoped, tag = 'scoped memory for tpu_custom_call.1']
    #allocation5 [shape = 'u8[8192]{0}', space=vmem, size = 0x2000, scoped, tag = 'input window, operand 1, single buffered']
    #allocation6 [shape = 's32[1]{0}', space=sflag, size = 0x4, scoped, tag = 'scoped memory for tpu_custom_call.1']
    #allocation7 [shape = 'u8[131072]{0}', space=vmem, size = 0x20000, scoped, tag = 'input window, operand 2, single buffered']
    #allocation8 [shape = 'u8[131072]{0}', space=vmem, size = 0x20000, scoped, tag = 'input window, operand 3, single buffered']
    #allocation9 [shape = 's32[1]{0}', space=sflag, size = 0x4, scoped, tag = 'scoped memory for tpu_custom_call.1']
    #allocation10 [shape = 'u8[4096]{0}', space=vmem, size = 0x1000, scoped, tag = 'output window, operand 0, single buffered']
    %9 = vsyncpa [#allocation3], 0
    %10 = vsyncpa [#allocation6], 0
    %11 = vsyncpa [#allocation9], 0
    %12 = vsyncpa [#allocation4], 0
    // Predicated region
    $region2: #{tpu_custom_call.1} parent=1 // pred_check
      _
    $region3: #{tpu_custom_call.1} parent=1 // pred_check_branch
      %14 = sbr.rel (0) target = $region5
    $region4: #{tpu_custom_call.1} parent=1 // pred_region
      %s16 = ssub.s32 128, 128
      %17 = vsyncadd [#allocation3], %s16
      %s19 = sshll.u32 [#allocation2], 4
      %s20 = int_to_ptr.vmem [resolvable:$true] %s19
      %22 = dma.hbm_to_vmem [thread:$0]  %s0, 128, %s20, [#allocation3]
    $region5: #{tpu_custom_call.1} parent=1 // pred_fallthru
      _
    // Predicated region
    $region6: #{tpu_custom_call.1} parent=1 // pred_check
      _
    $region7: #{tpu_custom_call.1} parent=1 // pred_check_branch
      %24 = sbr.rel (0) target = $region9
    $region8: #{tpu_custom_call.1} parent=1 // pred_region
      %s26 = ssub.s32 256, 256
      %27 = vsyncadd [#allocation6], %s26
      %s29 = sshll.u32 [#allocation5], 4
      %s30 = int_to_ptr.vmem [resolvable:$true] %s29
      %32 = dma.hbm_to_vmem [thread:$0]  %s1, 256, %s30, [#allocation6]
    $region9: #{tpu_custom_call.1} parent=1 // pred_fallthru
      _
    // Predicated region
    $region10: #{tpu_custom_call.1} parent=1 // pred_check
      _
    $region11: #{tpu_custom_call.1} parent=1 // pred_check_branch
      %34 = sbr.rel (0) target = $region13
    $region12: #{tpu_custom_call.1} parent=1 // pred_region
      %s36 = ssub.s32 4096, 4096
      %37 = vsyncadd [#allocation6], %s36
      %s38 = sshll.u32 [#allocation7], 4
      %s39 = int_to_ptr.vmem [resolvable:$true] %s38
      %44 = dma.hbm_to_vmem [thread:$0]  %s2, 4096, %s39, [#allocation6], 128, 128, 8
    $region13: #{tpu_custom_call.1} parent=1 // pred_fallthru
      _
    // Predicated region
    $region14: #{tpu_custom_call.1} parent=1 // pred_check
      _
    $region15: #{tpu_custom_call.1} parent=1 // pred_check_branch
      %46 = sbr.rel (0) target = $region17
    $region16: #{tpu_custom_call.1} parent=1 // pred_region
      %s48 = ssub.s32 4096, 4096
      %49 = vsyncadd [#allocation9], %s48
      %s50 = sshll.u32 [#allocation8], 4
      %s51 = int_to_ptr.vmem [resolvable:$true] %s50
      %56 = dma.hbm_to_vmem [thread:$0]  %s3, 4096, %s51, [#allocation9], 128, 128, 8
    $region17: #{tpu_custom_call.1} parent=1 // pred_fallthru
      _
    // Predicated region
    $region18: #{tpu_custom_call.1} parent=1 // pred_check
      _
    $region19: #{tpu_custom_call.1} parent=1 // pred_check_branch
      %58 = sbr.rel (0) target = $region21
    $region20: #{tpu_custom_call.1} parent=1 // pred_region
      %59 = dma.done [#allocation3], 128
    $region21: #{tpu_custom_call.1} parent=1 // pred_fallthru
      _
    // Predicated region
    $region22: #{tpu_custom_call.1} parent=1 // pred_check
      _
    $region23: #{tpu_custom_call.1} parent=1 // pred_check_branch
      %61 = sbr.rel (0) target = $region25
    $region24: #{tpu_custom_call.1} parent=1 // pred_region
      %62 = dma.done [#allocation6], 256
    $region25: #{tpu_custom_call.1} parent=1 // pred_fallthru
      _
    // Predicated region
    $region26: #{tpu_custom_call.1} parent=1 // pred_check
      _
    $region27: #{tpu_custom_call.1} parent=1 // pred_check_branch
      %64 = sbr.rel (0) target = $region29
    $region28: #{tpu_custom_call.1} parent=1 // pred_region
      %65 = dma.done [#allocation6], 4096
    $region29: #{tpu_custom_call.1} parent=1 // pred_fallthru
      _
    // Predicated region
    $region30: #{tpu_custom_call.1} parent=1 // pred_check
      _
    $region31: #{tpu_custom_call.1} parent=1 // pred_check_branch
      %67 = sbr.rel (0) target = $region33
    $region32: #{tpu_custom_call.1} parent=1 // pred_region
      %68 = dma.done [#allocation9], 4096
    $region33: #{tpu_custom_call.1} parent=1 // pred_fallthru
      _
    %v69 = vld [vmem:[#allocation2] sm:$0xff]
    %v70 = vld [vmem:[#allocation5] sm:$0xff]
    %v71 = vld [vmem:[#allocation5 + $0x8] sm:$0xff]
    %v72 = vlaneseq
    %v73 = vand.u32 %v72, 127
    %v74 = vadd.s32 %v73, 128
    %v75 = vand.u32 %v73, 1
    %v76 = vand.u32 %v74, 1
    %vm77 = vcmp.eq.s32.totalorder %v75, 0
    %vm78 = vcmp.eq.s32.totalorder %v76, 0
    %v80 = vcombine.high %v69, %v69
    %82 = vrot.lane.b32.xlu0 %v69, 127
    %v83 = vpop.permute.xlu0 %82
    %84 = vrot.lane.b32.xlu0 %v80, 127
    %v85 = vpop.permute.xlu0 %84
    %vm86 = vcmp.lt.s32.totalorder %v73, 127
    %v87 = vsel %vm86, %v83, %v85
    %v88 = vsel %vm86, %v85, %v83
    %89 = vrot.lane.b32.xlu0 %v69, 1
    %v90 = vpop.permute.xlu0 %89
    %91 = vrot.lane.b32.xlu0 %v80, 1
    %v92 = vpop.permute.xlu0 %91
    %vm93 = vcmp.lt.s32.totalorder %v73, 1
    %v94 = vsel %vm93, %v90, %v92
    %v95 = vsel %vm93, %v92, %v90
    %v96 = vsel %vm77, %v87, %v95
    %v97 = vsel %vm78, %v88, %v94
    %v100 = vcombine.low %v96, %v97
    %v102 = vadd.f32 %v69, %v100
    %v103 = vmul.f32 %v102, 0.5
    %v104 = vsub.f32 %v69, %v103
    %v105 = vmul.f32 %v104, %v104
    %v107 = vcombine.high %v105, %v105
    %109 = vrot.lane.b32.xlu0 %v105, 127
    %v110 = vpop.permute.xlu0 %109
    %111 = vrot.lane.b32.xlu0 %v107, 127
    %v112 = vpop.permute.xlu0 %111
    %v113 = vsel %vm86, %v110, %v112
    %v114 = vsel %vm86, %v112, %v110
    %115 = vrot.lane.b32.xlu0 %v105, 1
    %v116 = vpop.permute.xlu0 %115
    %117 = vrot.lane.b32.xlu0 %v107, 1
    %v118 = vpop.permute.xlu0 %117
    %v119 = vsel %vm93, %v116, %v118
    %v120 = vsel %vm93, %v118, %v116
    %v121 = vsel %vm77, %v113, %v120
    %v122 = vsel %vm78, %v114, %v119
    %v125 = vcombine.low %v121, %v122
    %v127 = vadd.f32 %v105, %v125
    %v128 = vmul.f32 %v127, 0.5
    %v129 = vadd.f32 %v128, 1e-05
    %v130 = vrsqrt.pop %v129
    %v131 = vmul.f32 %v104, %v130
    %v132 = vlaneseq
    %v133 = vshrl.u32 %v132, 7
    %v134 = vsub.s32 0, %v133
    %v135 = vrot.slane %v70, %v134
    %v136 = vlaneseq
    %v137 = vshrl.u32 %v136, 7
    %v138 = vsub.s32 0, %v137
    %v139 = vrot.slane %v71, %v138
    %v142 = vcombine.low %v135, %v139
    %v144 = vmul.f32 %v131, %v142
    %v145 = vlaneseq
    %v146 = vshrl.u32 %v145, 7
    %v147 = vsub.s32 1, %v146
    %v148 = vrot.slane %v70, %v147
    %v149 = vlaneseq
    %v150 = vshrl.u32 %v149, 7
    %v151 = vsub.s32 1, %v150
    %v152 = vrot.slane %v71, %v151
    %v155 = vcombine.low %v148, %v152
    %v157 = vadd.f32 %v144, %v155
    %v158 = vxor.u32 %v157, 2147483648
    %v159 = vmul.f32 %v158, 1.442695
    %v160 = vpow.pop %v159
    %v161 = vadd.f32 %v160, 1.0
    %v162 = vrcp.pop %v161
    %v163 = vmul.f32 1.0, %v162
    %v164 = vmul.f32 %v157, %v163
    %v166 = vcombine.high %v164, %v164
    %v168 = vpack.c.bf16 %v164, %v164
    %v169 = vpack.c.bf16 %v166, %v166
    %v170 = vld [vmem:[#allocation7] sm:$0xff]
    %v171 = vld [vmem:[#allocation7 + $0x8] sm:$0xff]
    %v172 = vld [vmem:[#allocation7 + $0x10] sm:$0xff]
    %v173 = vld [vmem:[#allocation7 + $0x18] sm:$0xff]
    %v174 = vld [vmem:[#allocation7 + $0x20] sm:$0xff]
    %v175 = vld [vmem:[#allocation7 + $0x28] sm:$0xff]
    %v176 = vld [vmem:[#allocation7 + $0x30] sm:$0xff]
    %v177 = vld [vmem:[#allocation7 + $0x38] sm:$0xff]
    %v178 = vld [vmem:[#allocation7 + $0x40] sm:$0xff]
    %v179 = vld [vmem:[#allocation7 + $0x48] sm:$0xff]
    %v180 = vld [vmem:[#allocation7 + $0x50] sm:$0xff]
    %v181 = vld [vmem:[#allocation7 + $0x58] sm:$0xff]
    %v182 = vld [vmem:[#allocation7 + $0x60] sm:$0xff]
    %v183 = vld [vmem:[#allocation7 + $0x68] sm:$0xff]
    %v184 = vld [vmem:[#allocation7 + $0x70] sm:$0xff]
    %v185 = vld [vmem:[#allocation7 + $0x78] sm:$0xff]
    %v186 = vld [vmem:[#allocation7 + $0x80] sm:$0xff]
    %v187 = vld [vmem:[#allocation7 + $0x88] sm:$0xff]
    %v188 = vld [vmem:[#allocation7 + $0x90] sm:$0xff]
    %v189 = vld [vmem:[#allocation7 + $0x98] sm:$0xff]
    %v190 = vld [vmem:[#allocation7 + $0xa0] sm:$0xff]
    %v191 = vld [vmem:[#allocation7 + $0xa8] sm:$0xff]
    %v192 = vld [vmem:[#allocation7 + $0xb0] sm:$0xff]
    %v193 = vld [vmem:[#allocation7 + $0xb8] sm:$0xff]
    %v194 = vld [vmem:[#allocation7 + $0xc0] sm:$0xff]
    %v195 = vld [vmem:[#allocation7 + $0xc8] sm:$0xff]
    %v196 = vld [vmem:[#allocation7 + $0xd0] sm:$0xff]
    %v197 = vld [vmem:[#allocation7 + $0xd8] sm:$0xff]
    %v198 = vld [vmem:[#allocation7 + $0xe0] sm:$0xff]
    %v199 = vld [vmem:[#allocation7 + $0xe8] sm:$0xff]
    %v200 = vld [vmem:[#allocation7 + $0xf0] sm:$0xff]
    %v201 = vld [vmem:[#allocation7 + $0xf8] sm:$0xff]
    %v202 = vlaneseq
    %v203 = vshrl.u32 %v202, 7
    %v204 = vsub.s32 2, %v203
    %v205 = vrot.slane %v70, %v204
    %v206 = vlaneseq
    %v207 = vshrl.u32 %v206, 7
    %v208 = vsub.s32 2, %v207
    %v209 = vrot.slane %v71, %v208
    %v242 = vunpack.c.l.b16 %v170
    %v243 = vunpack.c.h.b16 %v170
    %v244 = vunpack.c.l.b16 %v171
    %v245 = vunpack.c.h.b16 %v171
    %v246 = vunpack.c.l.b16 %v172
    %v247 = vunpack.c.h.b16 %v172
    %v248 = vunpack.c.l.b16 %v173
    %v249 = vunpack.c.h.b16 %v173
    %v250 = vunpack.c.l.b16 %v174
    %v251 = vunpack.c.h.b16 %v174
    %v252 = vunpack.c.l.b16 %v175
    %v253 = vunpack.c.h.b16 %v175
    %v254 = vunpack.c.l.b16 %v176
    %v255 = vunpack.c.h.b16 %v176
    %v256 = vunpack.c.l.b16 %v177
    %v257 = vunpack.c.h.b16 %v177
    %v258 = vunpack.c.l.b16 %v178
    %v259 = vunpack.c.h.b16 %v178
    %v260 = vunpack.c.l.b16 %v179
    %v261 = vunpack.c.h.b16 %v179
    %v262 = vunpack.c.l.b16 %v180
    %v263 = vunpack.c.h.b16 %v180
    %v264 = vunpack.c.l.b16 %v181
    %v265 = vunpack.c.h.b16 %v181
    %v266 = vunpack.c.l.b16 %v182
    %v267 = vunpack.c.h.b16 %v182
    %v268 = vunpack.c.l.b16 %v183
    %v269 = vunpack.c.h.b16 %v183
    %v270 = vunpack.c.l.b16 %v184
    %v271 = vunpack.c.h.b16 %v184
    %v272 = vunpack.c.l.b16 %v185
    %v273 = vunpack.c.h.b16 %v185
    %v274 = vunpack.c.l.b16 %v186
    %v275 = vunpack.c.h.b16 %v186
    %v276 = vunpack.c.l.b16 %v187
    %v277 = vunpack.c.h.b16 %v187
    %v278 = vunpack.c.l.b16 %v188
    %v279 = vunpack.c.h.b16 %v188
    %v280 = vunpack.c.l.b16 %v189
    %v281 = vunpack.c.h.b16 %v189
    %v282 = vunpack.c.l.b16 %v190
    %v283 = vunpack.c.h.b16 %v190
    %v284 = vunpack.c.l.b16 %v191
    %v285 = vunpack.c.h.b16 %v191
    %v286 = vunpack.c.l.b16 %v192
    %v287 = vunpack.c.h.b16 %v192
    %v288 = vunpack.c.l.b16 %v193
    %v289 = vunpack.c.h.b16 %v193
    %v290 = vunpack.c.l.b16 %v194
    %v291 = vunpack.c.h.b16 %v194
    %v292 = vunpack.c.l.b16 %v195
    %v293 = vunpack.c.h.b16 %v195
    %v294 = vunpack.c.l.b16 %v196
    %v295 = vunpack.c.h.b16 %v196
    %v296 = vunpack.c.l.b16 %v197
    %v297 = vunpack.c.h.b16 %v197
    %v298 = vunpack.c.l.b16 %v198
    %v299 = vunpack.c.h.b16 %v198
    %v300 = vunpack.c.l.b16 %v199
    %v301 = vunpack.c.h.b16 %v199
    %v302 = vunpack.c.l.b16 %v200
    %v303 = vunpack.c.h.b16 %v200
    %v304 = vunpack.c.l.b16 %v201
    %v305 = vunpack.c.h.b16 %v201
    %v306 = vpack.c.b16 %v244, %v242
    %v307 = vpack.c.b16 %v245, %v243
    %v308 = vpack.c.b16 %v248, %v246
    %v309 = vpack.c.b16 %v249, %v247
    %v310 = vpack.c.b16 %v252, %v250
    %v311 = vpack.c.b16 %v253, %v251
    %v312 = vpack.c.b16 %v256, %v254
    %v313 = vpack.c.b16 %v257, %v255
    %v314 = vpack.c.b16 %v260, %v258
    %v315 = vpack.c.b16 %v261, %v259
    %v316 = vpack.c.b16 %v264, %v262
    %v317 = vpack.c.b16 %v265, %v263
    %v318 = vpack.c.b16 %v268, %v266
    %v319 = vpack.c.b16 %v269, %v267
    %v320 = vpack.c.b16 %v272, %v270
    %v321 = vpack.c.b16 %v273, %v271
    %v322 = vpack.c.b16 %v276, %v274
    %v323 = vpack.c.b16 %v277, %v275
    %v324 = vpack.c.b16 %v280, %v278
    %v325 = vpack.c.b16 %v281, %v279
    %v326 = vpack.c.b16 %v284, %v282
    %v327 = vpack.c.b16 %v285, %v283
    %v328 = vpack.c.b16 %v288, %v286
    %v329 = vpack.c.b16 %v289, %v287
    %v330 = vpack.c.b16 %v292, %v290
    %v331 = vpack.c.b16 %v293, %v291
    %v332 = vpack.c.b16 %v296, %v294
    %v333 = vpack.c.b16 %v297, %v295
    %v334 = vpack.c.b16 %v300, %v298
    %v335 = vpack.c.b16 %v301, %v299
    %v336 = vpack.c.b16 %v304, %v302
    %v337 = vpack.c.b16 %v305, %v303
    %370 = vmatprep.subr.bf16.mxu0 %v307
    %371 = vmatpush1.bf16.msra.mxu0 %v306
    %372 = vmatprep.subr.bf16.mxu0 %v309
    %373 = vmatpush1.bf16.msra.mxu0 %v308
    %374 = vmatprep.subr.bf16.mxu0 %v311
    %375 = vmatpush1.bf16.msra.mxu0 %v310
    %376 = vmatprep.subr.bf16.mxu0 %v313
    %377 = vmatpush1.bf16.msra.mxu0 %v312
    %378 = vmatprep.subr.bf16.mxu0 %v315
    %379 = vmatpush1.bf16.msra.mxu0 %v314
    %380 = vmatprep.subr.bf16.mxu0 %v317
    %381 = vmatpush1.bf16.msra.mxu0 %v316
    %382 = vmatprep.subr.bf16.mxu0 %v319
    %383 = vmatpush1.bf16.msra.mxu0 %v318
    %384 = vmatprep.subr.bf16.mxu0 %v321
    %385 = vmatpush1.bf16.msra.mxu0 %v320
    %386 = vmatprep.subr.bf16.mxu0 %v323
    %387 = vmatpush1.bf16.msra.mxu0 %v322
    %388 = vmatprep.subr.bf16.mxu0 %v325
    %389 = vmatpush1.bf16.msra.mxu0 %v324
    %390 = vmatprep.subr.bf16.mxu0 %v327
    %391 = vmatpush1.bf16.msra.mxu0 %v326
    %392 = vmatprep.subr.bf16.mxu0 %v329
    %393 = vmatpush1.bf16.msra.mxu0 %v328
    %394 = vmatprep.subr.bf16.mxu0 %v331
    %395 = vmatpush1.bf16.msra.mxu0 %v330
    %396 = vmatprep.subr.bf16.mxu0 %v333
    %397 = vmatpush1.bf16.msra.mxu0 %v332
    %398 = vmatprep.subr.bf16.mxu0 %v335
    %399 = vmatpush1.bf16.msra.mxu0 %v334
    %400 = vmatprep.subr.bf16.mxu0 %v337
    %401 = vmatpush1.bf16.msra.mxu0 %v336
    %402 = vmatprep.mubr.bf16.mxu0 %v169
    %403 = vmatmul.mubr.bf16.gmra.mrb[0].mxu0 %v168
    %v404 = vpop.f32.mrb[0].mxu0
    %v405 = vadd.f32 %v205, %v404
    %v406 = vpop.f32.mrb[0].mxu0
    %v407 = vadd.f32 %v209, %v406
    %v408 = vpop.f32.mrb[0].mxu0
    %v409 = vpop.f32.mrb[0].mxu0
    %410 = vdwg.mxu0
    %411 = vrot.lane.b32.xlu0 %v405, 127
    %v412 = vpop.permute.xlu0 %411
    %413 = vrot.lane.b32.xlu0 %v407, 127
    %v414 = vpop.permute.xlu0 %413
    %v415 = vsel %vm86, %v412, %v414
    %v416 = vsel %vm86, %v414, %v412
    %417 = vrot.lane.b32.xlu0 %v405, 1
    %v418 = vpop.permute.xlu0 %417
    %419 = vrot.lane.b32.xlu0 %v407, 1
    %v420 = vpop.permute.xlu0 %419
    %v421 = vsel %vm93, %v418, %v420
    %v422 = vsel %vm93, %v420, %v418
    %v423 = vsel %vm77, %v415, %v422
    %v424 = vsel %vm78, %v416, %v421
    %v425 = vadd.f32 %v405, %v423
    %v426 = vadd.f32 %v407, %v424
    %v427 = vmul.f32 %v425, 0.5
    %v428 = vmul.f32 %v426, 0.5
    %v429 = vsub.f32 %v405, %v427
    %v430 = vsub.f32 %v407, %v428
    %v431 = vmul.f32 %v429, %v429
    %v432 = vmul.f32 %v430, %v430
    %433 = vrot.lane.b32.xlu0 %v431, 127
    %v434 = vpop.permute.xlu0 %433
    %435 = vrot.lane.b32.xlu0 %v432, 127
    %v436 = vpop.permute.xlu0 %435
    %v437 = vsel %vm86, %v434, %v436
    %v438 = vsel %vm86, %v436, %v434
    %439 = vrot.lane.b32.xlu0 %v431, 1
    %v440 = vpop.permute.xlu0 %439
    %441 = vrot.lane.b32.xlu0 %v432, 1
    %v442 = vpop.permute.xlu0 %441
    %v443 = vsel %vm93, %v440, %v442
    %v444 = vsel %vm93, %v442, %v440
    %v445 = vsel %vm77, %v437, %v444
    %v446 = vsel %vm78, %v438, %v443
    %v447 = vadd.f32 %v431, %v445
    %v448 = vadd.f32 %v432, %v446
    %v449 = vmul.f32 %v447, 0.5
    %v450 = vmul.f32 %v448, 0.5
    %v451 = vadd.f32 %v449, 1e-05
    %v452 = vadd.f32 %v450, 1e-05
    %v453 = vrsqrt.pop %v451
    %v454 = vrsqrt.pop %v452
    %v455 = vmul.f32 %v429, %v453
    %v456 = vmul.f32 %v430, %v454
    %v457 = vlaneseq
    %v458 = vshrl.u32 %v457, 7
    %v459 = vsub.s32 3, %v458
    %v460 = vrot.slane %v70, %v459
    %v461 = vlaneseq
    %v462 = vshrl.u32 %v461, 7
    %v463 = vsub.s32 3, %v462
    %v464 = vrot.slane %v71, %v463
    %v465 = vmul.f32 %v455, %v460
    %v466 = vmul.f32 %v456, %v464
    %v467 = vlaneseq
    %v468 = vshrl.u32 %v467, 7
    %v469 = vsub.s32 4, %v468
    %v470 = vrot.slane %v70, %v469
    %v471 = vlaneseq
    %v472 = vshrl.u32 %v471, 7
    %v473 = vsub.s32 4, %v472
    %v474 = vrot.slane %v71, %v473
    %v475 = vadd.f32 %v465, %v470
    %v476 = vadd.f32 %v466, %v474
    %v477 = vxor.u32 %v475, 2147483648
    %v478 = vxor.u32 %v476, 2147483648
    %v479 = vmul.f32 %v477, 1.442695
    %v480 = vpow.pop %v479
    %v481 = vmul.f32 %v478, 1.442695
    %v482 = vpow.pop %v481
    %v483 = vadd.f32 %v480, 1.0
    %v484 = vadd.f32 %v482, 1.0
    %v485 = vrcp.pop %v483
    %v486 = vmul.f32 1.0, %v485
    %v487 = vrcp.pop %v484
    %v488 = vmul.f32 1.0, %v487
    %v489 = vmul.f32 %v475, %v486
    %v490 = vmul.f32 %v476, %v488
    %v491 = vpack.c.bf16 %v489, %v489
    %v492 = vpack.c.bf16 %v490, %v490
    %v493 = vld [vmem:[#allocation8] sm:$0xff]
    %v494 = vld [vmem:[#allocation8 + $0x8] sm:$0xff]
    %v495 = vld [vmem:[#allocation8 + $0x10] sm:$0xff]
    %v496 = vld [vmem:[#allocation8 + $0x18] sm:$0xff]
    %v497 = vld [vmem:[#allocation8 + $0x20] sm:$0xff]
    %v498 = vld [vmem:[#allocation8 + $0x28] sm:$0xff]
    %v499 = vld [vmem:[#allocation8 + $0x30] sm:$0xff]
    %v500 = vld [vmem:[#allocation8 + $0x38] sm:$0xff]
    %v501 = vld [vmem:[#allocation8 + $0x40] sm:$0xff]
    %v502 = vld [vmem:[#allocation8 + $0x48] sm:$0xff]
    %v503 = vld [vmem:[#allocation8 + $0x50] sm:$0xff]
    %v504 = vld [vmem:[#allocation8 + $0x58] sm:$0xff]
    %v505 = vld [vmem:[#allocation8 + $0x60] sm:$0xff]
    %v506 = vld [vmem:[#allocation8 + $0x68] sm:$0xff]
    %v507 = vld [vmem:[#allocation8 + $0x70] sm:$0xff]
    %v508 = vld [vmem:[#allocation8 + $0x78] sm:$0xff]
    %v509 = vld [vmem:[#allocation8 + $0x80] sm:$0xff]
    %v510 = vld [vmem:[#allocation8 + $0x88] sm:$0xff]
    %v511 = vld [vmem:[#allocation8 + $0x90] sm:$0xff]
    %v512 = vld [vmem:[#allocation8 + $0x98] sm:$0xff]
    %v513 = vld [vmem:[#allocation8 + $0xa0] sm:$0xff]
    %v514 = vld [vmem:[#allocation8 + $0xa8] sm:$0xff]
    %v515 = vld [vmem:[#allocation8 + $0xb0] sm:$0xff]
    %v516 = vld [vmem:[#allocation8 + $0xb8] sm:$0xff]
    %v517 = vld [vmem:[#allocation8 + $0xc0] sm:$0xff]
    %v518 = vld [vmem:[#allocation8 + $0xc8] sm:$0xff]
    %v519 = vld [vmem:[#allocation8 + $0xd0] sm:$0xff]
    %v520 = vld [vmem:[#allocation8 + $0xd8] sm:$0xff]
    %v521 = vld [vmem:[#allocation8 + $0xe0] sm:$0xff]
    %v522 = vld [vmem:[#allocation8 + $0xe8] sm:$0xff]
    %v523 = vld [vmem:[#allocation8 + $0xf0] sm:$0xff]
    %v524 = vld [vmem:[#allocation8 + $0xf8] sm:$0xff]
    %v525 = vlaneseq
    %v526 = vshrl.u32 %v525, 7
    %v527 = vsub.s32 5, %v526
    %v528 = vrot.slane %v70, %v527
    %v529 = vlaneseq
    %v530 = vshrl.u32 %v529, 7
    %v531 = vsub.s32 5, %v530
    %v532 = vrot.slane %v71, %v531
    %v565 = vunpack.c.l.b16 %v493
    %v566 = vunpack.c.h.b16 %v493
    %v567 = vunpack.c.l.b16 %v494
    %v568 = vunpack.c.h.b16 %v494
    %v569 = vunpack.c.l.b16 %v495
    %v570 = vunpack.c.h.b16 %v495
    %v571 = vunpack.c.l.b16 %v496
    %v572 = vunpack.c.h.b16 %v496
    %v573 = vunpack.c.l.b16 %v497
    %v574 = vunpack.c.h.b16 %v497
    %v575 = vunpack.c.l.b16 %v498
    %v576 = vunpack.c.h.b16 %v498
    %v577 = vunpack.c.l.b16 %v499
    %v578 = vunpack.c.h.b16 %v499
    %v579 = vunpack.c.l.b16 %v500
    %v580 = vunpack.c.h.b16 %v500
    %v581 = vunpack.c.l.b16 %v501
    %v582 = vunpack.c.h.b16 %v501
    %v583 = vunpack.c.l.b16 %v502
    %v584 = vunpack.c.h.b16 %v502
    %v585 = vunpack.c.l.b16 %v503
    %v586 = vunpack.c.h.b16 %v503
    %v587 = vunpack.c.l.b16 %v504
    %v588 = vunpack.c.h.b16 %v504
    %v589 = vunpack.c.l.b16 %v505
    %v590 = vunpack.c.h.b16 %v505
    %v591 = vunpack.c.l.b16 %v506
    %v592 = vunpack.c.h.b16 %v506
    %v593 = vunpack.c.l.b16 %v507
    %v594 = vunpack.c.h.b16 %v507
    %v595 = vunpack.c.l.b16 %v508
    %v596 = vunpack.c.h.b16 %v508
    %v597 = vunpack.c.l.b16 %v509
    %v598 = vunpack.c.h.b16 %v509
    %v599 = vunpack.c.l.b16 %v510
    %v600 = vunpack.c.h.b16 %v510
    %v601 = vunpack.c.l.b16 %v511
    %v602 = vunpack.c.h.b16 %v511
    %v603 = vunpack.c.l.b16 %v512
    %v604 = vunpack.c.h.b16 %v512
    %v605 = vunpack.c.l.b16 %v513
    %v606 = vunpack.c.h.b16 %v513
    %v607 = vunpack.c.l.b16 %v514
    %v608 = vunpack.c.h.b16 %v514
    %v609 = vunpack.c.l.b16 %v515
    %v610 = vunpack.c.h.b16 %v515
    %v611 = vunpack.c.l.b16 %v516
    %v612 = vunpack.c.h.b16 %v516
    %v613 = vunpack.c.l.b16 %v517
    %v614 = vunpack.c.h.b16 %v517
    %v615 = vunpack.c.l.b16 %v518
    %v616 = vunpack.c.h.b16 %v518
    %v617 = vunpack.c.l.b16 %v519
    %v618 = vunpack.c.h.b16 %v519
    %v619 = vunpack.c.l.b16 %v520
    %v620 = vunpack.c.h.b16 %v520
    %v621 = vunpack.c.l.b16 %v521
    %v622 = vunpack.c.h.b16 %v521
    %v623 = vunpack.c.l.b16 %v522
    %v624 = vunpack.c.h.b16 %v522
    %v625 = vunpack.c.l.b16 %v523
    %v626 = vunpack.c.h.b16 %v523
    %v627 = vunpack.c.l.b16 %v524
    %v628 = vunpack.c.h.b16 %v524
    %v629 = vpack.c.b16 %v567, %v565
    %v630 = vpack.c.b16 %v568, %v566
    %v631 = vpack.c.b16 %v571, %v569
    %v632 = vpack.c.b16 %v572, %v570
    %v633 = vpack.c.b16 %v575, %v573
    %v634 = vpack.c.b16 %v576, %v574
    %v635 = vpack.c.b16 %v579, %v577
    %v636 = vpack.c.b16 %v580, %v578
    %v637 = vpack.c.b16 %v583, %v581
    %v638 = vpack.c.b16 %v584, %v582
    %v639 = vpack.c.b16 %v587, %v585
    %v640 = vpack.c.b16 %v588, %v586
    %v641 = vpack.c.b16 %v591, %v589
    %v642 = vpack.c.b16 %v592, %v590
    %v643 = vpack.c.b16 %v595, %v593
    %v644 = vpack.c.b16 %v596, %v594
    %v645 = vpack.c.b16 %v599, %v597
    %v646 = vpack.c.b16 %v600, %v598
    %v647 = vpack.c.b16 %v603, %v601
    %v648 = vpack.c.b16 %v604, %v602
    %v649 = vpack.c.b16 %v607, %v605
    %v650 = vpack.c.b16 %v608, %v606
    %v651 = vpack.c.b16 %v611, %v609
    %v652 = vpack.c.b16 %v612, %v610
    %v653 = vpack.c.b16 %v615, %v613
    %v654 = vpack.c.b16 %v616, %v614
    %v655 = vpack.c.b16 %v619, %v617
    %v656 = vpack.c.b16 %v620, %v618
    %v657 = vpack.c.b16 %v623, %v621
    %v658 = vpack.c.b16 %v624, %v622
    %v659 = vpack.c.b16 %v627, %v625
    %v660 = vpack.c.b16 %v628, %v626
    %693 = vmatprep.subr.bf16.mxu0 %v630
    %694 = vmatpush1.bf16.msra.mxu0 %v629
    %695 = vmatprep.subr.bf16.mxu0 %v632
    %696 = vmatpush1.bf16.msra.mxu0 %v631
    %697 = vmatprep.subr.bf16.mxu0 %v634
    %698 = vmatpush1.bf16.msra.mxu0 %v633
    %699 = vmatprep.subr.bf16.mxu0 %v636
    %700 = vmatpush1.bf16.msra.mxu0 %v635
    %701 = vmatprep.subr.bf16.mxu0 %v638
    %702 = vmatpush1.bf16.msra.mxu0 %v637
    %703 = vmatprep.subr.bf16.mxu0 %v640
    %704 = vmatpush1.bf16.msra.mxu0 %v639
    %705 = vmatprep.subr.bf16.mxu0 %v642
    %706 = vmatpush1.bf16.msra.mxu0 %v641
    %707 = vmatprep.subr.bf16.mxu0 %v644
    %708 = vmatpush1.bf16.msra.mxu0 %v643
    %709 = vmatprep.subr.bf16.mxu0 %v646
    %710 = vmatpush1.bf16.msra.mxu0 %v645
    %711 = vmatprep.subr.bf16.mxu0 %v648
    %712 = vmatpush1.bf16.msra.mxu0 %v647
    %713 = vmatprep.subr.bf16.mxu0 %v650
    %714 = vmatpush1.bf16.msra.mxu0 %v649
    %715 = vmatprep.subr.bf16.mxu0 %v652
    %716 = vmatpush1.bf16.msra.mxu0 %v651
    %717 = vmatprep.subr.bf16.mxu0 %v654
    %718 = vmatpush1.bf16.msra.mxu0 %v653
    %719 = vmatprep.subr.bf16.mxu0 %v656
    %720 = vmatpush1.bf16.msra.mxu0 %v655
    %721 = vmatprep.subr.bf16.mxu0 %v658
    %722 = vmatpush1.bf16.msra.mxu0 %v657
    %723 = vmatprep.subr.bf16.mxu0 %v660
    %724 = vmatpush1.bf16.msra.mxu0 %v659
    %725 = vmatprep.mubr.bf16.mxu0 %v492
    %726 = vmatmul.mubr.bf16.gmra.mrb[0].mxu0 %v491
    %v727 = vpop.f32.mrb[0].mxu0
    %v728 = vadd.f32 %v528, %v727
    %v729 = vpop.f32.mrb[0].mxu0
    %v730 = vadd.f32 %v532, %v729
    %v731 = vpop.f32.mrb[0].mxu0
    %v732 = vpop.f32.mrb[0].mxu0
    %733 = vdwg.mxu0
    %v734 = vadd.f32 %v728, %v69
    %v735 = vadd.f32 %v730, %v80
    %v738 = vcombine.low %v734, %v735
    %740 = vst [vmem:[#allocation10] sm:$0xff] %v738
    // Predicated region
    $region34: #{tpu_custom_call.1} parent=1 // pred_check
      _
    $region35: #{tpu_custom_call.1} parent=1 // pred_check_branch
      %742 = sbr.rel (0) target = $region37
    $region36: #{tpu_custom_call.1} parent=1 // pred_region
      %s744 = ssub.s32 128, 128
      %745 = vsyncadd [#allocation4], %s744
      %s747 = sshll.u32 [#allocation10], 4
      %s748 = int_to_ptr.vmem [resolvable:$true] %s747
      %750 = dma.vmem_to_hbm [thread:$0]  %s748, 128, %s4, [#allocation4]
    $region37: #{tpu_custom_call.1} parent=1 // pred_fallthru
      _
    // Predicated region
    $region38: #{tpu_custom_call.1} parent=1 // pred_check
      _
    $region39: #{tpu_custom_call.1} parent=1 // pred_check_branch
      %752 = sbr.rel (0) target = $region41
    $region40: #{tpu_custom_call.1} parent=1 // pred_region
      %753 = dma.done [#allocation4], 128
    $region41: #{tpu_custom_call.1} parent=1 // pred_fallthru
      _
    %754 = vsyncpa [#allocation3], 1
    %755 = vsyncpa [#allocation6], 1
    %756 = vsyncpa [#allocation9], 1
    %757 = vsyncpa [#allocation4], 1

// kernel: tpu_custom_call.1
$region0: #{tpu_custom_call.1}
  #allocation0 [shape = 'u32[]', space=smem, size = 0x4, offset = 0x4, fixed_abs, tag = 'smem constant byte address 0x4 - core index']
  #allocation1 [shape = 'u32[144,128]{1,0:T(1,128)}', space=vmem, size = 0x12000, scoped, tag = 'internal scratch']
  %s0 = inlined_call_operand.hbm [shape: f32[4,256], index: 0, kind: input, shape index: {}]
  %s1 = inlined_call_operand.hbm [shape: f32[8,256], index: 1, kind: input, shape index: {}]
  %s2 = inlined_call_operand.hbm [shape: bf16[256,256], index: 2, kind: input, shape index: {}]
  %s3 = inlined_call_operand.hbm [shape: bf16[256,256], index: 3, kind: input, shape index: {}]
  %s4 = inlined_call_operand.hbm [shape: f32[4,256], index: 4, kind: output, shape index: {}]
  %s5 = sld [smem:[#allocation0]]
  $region42: #{tpu_custom_call.1} parent=0
    _
  %s7 = ssub.s32 1, %s5
  %s8 = scalar_select 0, %s7, %s5
  $region1: #{tpu_custom_call.1} parent=0
    #allocation2 [shape = 'u8[4096]{0}', space=vmem, size = 0x1000, scoped, tag = 'input window, operand 0, single buffered']
    #allocation3 [shape = 's32[1]{0}', space=sflag, size = 0x4, scoped, tag = 'scoped memory for tpu_custom_call.1']
    #allocation4 [shape = 's32[1]{0}', space=sflag, size = 0x4, scoped, tag = 'scoped memory for tpu_custom_call.1']
    #allocation5 [shape = 'u8[8192]{0}', space=vmem, size = 0x2000, scoped, tag = 'input window, operand 1, single buffered']
    #allocation6 [shape = 's32[1]{0}', space=sflag, size = 0x4, scoped, tag = 'scoped memory for tpu_custom_call.1']
    #allocation7 [shape = 'u8[131072]{0}', space=vmem, size = 0x20000, scoped, tag = 'input window, operand 2, single buffered']
    #allocation8 [shape = 'u8[131072]{0}', space=vmem, size = 0x20000, scoped, tag = 'input window, operand 3, single buffered']
    #allocation9 [shape = 's32[1]{0}', space=sflag, size = 0x4, scoped, tag = 'scoped memory for tpu_custom_call.1']
    #allocation10 [shape = 'u8[4096]{0}', space=vmem, size = 0x1000, scoped, tag = 'output window, operand 0, single buffered']
    %9 = vsyncpa [#allocation3], 0
    %10 = vsyncpa [#allocation6], 0
    %11 = vsyncpa [#allocation9], 0
    %12 = vsyncpa [#allocation4], 0
    // Predicated region
    $region2: #{tpu_custom_call.1} parent=1 // pred_check
      _
    $region3: #{tpu_custom_call.1} parent=1 // pred_check_branch
      %14 = sbr.rel (0) target = $region5
    $region4: #{tpu_custom_call.1} parent=1 // pred_region
      %s16 = ssub.s32 128, 128
      %17 = vsyncadd [#allocation3], %s16
      %s19 = sshll.u32 [#allocation2], 4
      %s20 = int_to_ptr.vmem [resolvable:$true] %s19
      %22 = dma.hbm_to_vmem [thread:$0]  %s0, 128, %s20, [#allocation3]
    $region5: #{tpu_custom_call.1} parent=1 // pred_fallthru
      _
    // Predicated region
    $region6: #{tpu_custom_call.1} parent=1 // pred_check
      _
    $region7: #{tpu_custom_call.1} parent=1 // pred_check_branch
      %24 = sbr.rel (0) target = $region9
    $region8: #{tpu_custom_call.1} parent=1 // pred_region
      %s26 = ssub.s32 256, 256
      %27 = vsyncadd [#allocation6], %s26
      %s29 = sshll.u32 [#allocation5], 4
      %s30 = int_to_ptr.vmem [resolvable:$true] %s29
      %32 = dma.hbm_to_vmem [thread:$0]  %s1, 256, %s30, [#allocation6]
    $region9: #{tpu_custom_call.1} parent=1 // pred_fallthru
      _
    // Predicated region
    $region10: #{tpu_custom_call.1} parent=1 // pred_check
      _
    $region11: #{tpu_custom_call.1} parent=1 // pred_check_branch
      %34 = sbr.rel (0) target = $region13
    $region12: #{tpu_custom_call.1} parent=1 // pred_region
      %s36 = ssub.s32 4096, 4096
      %37 = vsyncadd [#allocation6], %s36
      %s38 = sshll.u32 [#allocation7], 4
      %s39 = int_to_ptr.vmem [resolvable:$true] %s38
      %44 = dma.hbm_to_vmem [thread:$0]  %s2, 4096, %s39, [#allocation6], 128, 128, 8
    $region13: #{tpu_custom_call.1} parent=1 // pred_fallthru
      _
    // Predicated region
    $region14: #{tpu_custom_call.1} parent=1 // pred_check
      _
    $region15: #{tpu_custom_call.1} parent=1 // pred_check_branch
      %46 = sbr.rel (0) target = $region17
    $region16: #{tpu_custom_call.1} parent=1 // pred_region
      %s48 = ssub.s32 4096, 4096
      %49 = vsyncadd [#allocation9], %s48
      %s50 = sshll.u32 [#allocation8], 4
      %s51 = int_to_ptr.vmem [resolvable:$true] %s50
      %56 = dma.hbm_to_vmem [thread:$0]  %s3, 4096, %s51, [#allocation9], 128, 128, 8
    $region17: #{tpu_custom_call.1} parent=1 // pred_fallthru
      _
    // Predicated region
    $region18: #{tpu_custom_call.1} parent=1 // pred_check
      _
    $region19: #{tpu_custom_call.1} parent=1 // pred_check_branch
      %58 = sbr.rel (0) target = $region21
    $region20: #{tpu_custom_call.1} parent=1 // pred_region
      %59 = dma.done [#allocation3], 128
    $region21: #{tpu_custom_call.1} parent=1 // pred_fallthru
      _
    // Predicated region
    $region22: #{tpu_custom_call.1} parent=1 // pred_check
      _
    $region23: #{tpu_custom_call.1} parent=1 // pred_check_branch
      %61 = sbr.rel (0) target = $region25
    $region24: #{tpu_custom_call.1} parent=1 // pred_region
      %62 = dma.done [#allocation6], 256
    $region25: #{tpu_custom_call.1} parent=1 // pred_fallthru
      _
    // Predicated region
    $region26: #{tpu_custom_call.1} parent=1 // pred_check
      _
    $region27: #{tpu_custom_call.1} parent=1 // pred_check_branch
      %64 = sbr.rel (0) target = $region29
    $region28: #{tpu_custom_call.1} parent=1 // pred_region
      %65 = dma.done [#allocation6], 4096
    $region29: #{tpu_custom_call.1} parent=1 // pred_fallthru
      _
    // Predicated region
    $region30: #{tpu_custom_call.1} parent=1 // pred_check
      _
    $region31: #{tpu_custom_call.1} parent=1 // pred_check_branch
      %67 = sbr.rel (0) target = $region33
    $region32: #{tpu_custom_call.1} parent=1 // pred_region
      %68 = dma.done [#allocation9], 4096
    $region33: #{tpu_custom_call.1} parent=1 // pred_fallthru
      _
    %v69 = vld [vmem:[#allocation2] sm:$0xff]
    %v70 = vld [vmem:[#allocation5] sm:$0xff]
    %v71 = vld [vmem:[#allocation5 + $0x8] sm:$0xff]
    %v72 = vlaneseq
    %v73 = vand.u32 %v72, 127
    %v74 = vadd.s32 %v73, 128
    %v75 = vand.u32 %v73, 1
    %v76 = vand.u32 %v74, 1
    %vm77 = vcmp.eq.s32.totalorder %v75, 0
    %vm78 = vcmp.eq.s32.totalorder %v76, 0
    %v80 = vcombine.high %v69, %v69
    %82 = vrot.lane.b32.xlu0 %v69, 127
    %v83 = vpop.permute.xlu0 %82
    %84 = vrot.lane.b32.xlu0 %v80, 127
    %v85 = vpop.permute.xlu0 %84
    %vm86 = vcmp.lt.s32.totalorder %v73, 127
    %v87 = vsel %vm86, %v83, %v85
    %v88 = vsel %vm86, %v85, %v83
    %89 = vrot.lane.b32.xlu0 %v69, 1
    %v90 = vpop.permute.xlu0 %89
    %91 = vrot.lane.b32.xlu0 %v80, 1
    %v92 = vpop.permute.xlu0 %91
    %vm93 = vcmp.lt.s32.totalorder %v73, 1
    %v94 = vsel %vm93, %v90, %v92
    %v95 = vsel %vm93, %v92, %v90
    %v96 = vsel %vm77, %v87, %v95
    %v97 = vsel %vm78, %v88, %v94
    %v100 = vcombine.low %v96, %v97
    %v102 = vadd.f32 %v69, %v100
    %v103 = vmul.f32 %v102, 0.5
    %v104 = vsub.f32 %v69, %v103
    %v105 = vmul.f32 %v104, %v104
    %v107 = vcombine.high %v105, %v105
    %109 = vrot.lane.b32.xlu0 %v105, 127
    %v110 = vpop.permute.xlu0 %109
    %111 = vrot.lane.b32.xlu0 %v107, 127
    %v112 = vpop.permute.xlu0 %111
    %v113 = vsel %vm86, %v110, %v112
    %v114 = vsel %vm86, %v112, %v110
    %115 = vrot.lane.b32.xlu0 %v105, 1
    %v116 = vpop.permute.xlu0 %115
    %117 = vrot.lane.b32.xlu0 %v107, 1
    %v118 = vpop.permute.xlu0 %117
    %v119 = vsel %vm93, %v116, %v118
    %v120 = vsel %vm93, %v118, %v116
    %v121 = vsel %vm77, %v113, %v120
    %v122 = vsel %vm78, %v114, %v119
    %v125 = vcombine.low %v121, %v122
    %v127 = vadd.f32 %v105, %v125
    %v128 = vmul.f32 %v127, 0.5
    %v129 = vadd.f32 %v128, 1e-05
    %v130 = vrsqrt.pop %v129
    %v131 = vmul.f32 %v104, %v130
    %v132 = vlaneseq
    %v133 = vshrl.u32 %v132, 7
    %v134 = vsub.s32 0, %v133
    %v135 = vrot.slane %v70, %v134
    %v136 = vlaneseq
    %v137 = vshrl.u32 %v136, 7
    %v138 = vsub.s32 0, %v137
    %v139 = vrot.slane %v71, %v138
    %v142 = vcombine.low %v135, %v139
    %v144 = vmul.f32 %v131, %v142
    %v145 = vlaneseq
    %v146 = vshrl.u32 %v145, 7
    %v147 = vsub.s32 1, %v146
    %v148 = vrot.slane %v70, %v147
    %v149 = vlaneseq
    %v150 = vshrl.u32 %v149, 7
    %v151 = vsub.s32 1, %v150
    %v152 = vrot.slane %v71, %v151
    %v155 = vcombine.low %v148, %v152
    %v157 = vadd.f32 %v144, %v155
    %v158 = vxor.u32 %v157, 2147483648
    %v159 = vmul.f32 %v158, 1.442695
    %v160 = vpow.pop %v159
    %v161 = vadd.f32 %v160, 1.0
    %v162 = vrcp.pop %v161
    %v163 = vmul.f32 1.0, %v162
    %v164 = vmul.f32 %v157, %v163
    %v166 = vcombine.high %v164, %v164
    %v168 = vpack.c.bf16 %v164, %v164
    %v169 = vpack.c.bf16 %v166, %v166
    %v170 = vld [vmem:[#allocation7] sm:$0xff]
    %v171 = vld [vmem:[#allocation7 + $0x8] sm:$0xff]
    %v172 = vld [vmem:[#allocation7 + $0x10] sm:$0xff]
    %v173 = vld [vmem:[#allocation7 + $0x18] sm:$0xff]
    %v174 = vld [vmem:[#allocation7 + $0x20] sm:$0xff]
    %v175 = vld [vmem:[#allocation7 + $0x28] sm:$0xff]
    %v176 = vld [vmem:[#allocation7 + $0x30] sm:$0xff]
    %v177 = vld [vmem:[#allocation7 + $0x38] sm:$0xff]
    %v178 = vld [vmem:[#allocation7 + $0x40] sm:$0xff]
    %v179 = vld [vmem:[#allocation7 + $0x48] sm:$0xff]
    %v180 = vld [vmem:[#allocation7 + $0x50] sm:$0xff]
    %v181 = vld [vmem:[#allocation7 + $0x58] sm:$0xff]
    %v182 = vld [vmem:[#allocation7 + $0x60] sm:$0xff]
    %v183 = vld [vmem:[#allocation7 + $0x68] sm:$0xff]
    %v184 = vld [vmem:[#allocation7 + $0x70] sm:$0xff]
    %v185 = vld [vmem:[#allocation7 + $0x78] sm:$0xff]
    %v186 = vld [vmem:[#allocation7 + $0x80] sm:$0xff]
    %v187 = vld [vmem:[#allocation7 + $0x88] sm:$0xff]
    %v188 = vld [vmem:[#allocation7 + $0x90] sm:$0xff]
    %v189 = vld [vmem:[#allocation7 + $0x98] sm:$0xff]
    %v190 = vld [vmem:[#allocation7 + $0xa0] sm:$0xff]
    %v191 = vld [vmem:[#allocation7 + $0xa8] sm:$0xff]
    %v192 = vld [vmem:[#allocation7 + $0xb0] sm:$0xff]
    %v193 = vld [vmem:[#allocation7 + $0xb8] sm:$0xff]
    %v194 = vld [vmem:[#allocation7 + $0xc0] sm:$0xff]
    %v195 = vld [vmem:[#allocation7 + $0xc8] sm:$0xff]
    %v196 = vld [vmem:[#allocation7 + $0xd0] sm:$0xff]
    %v197 = vld [vmem:[#allocation7 + $0xd8] sm:$0xff]
    %v198 = vld [vmem:[#allocation7 + $0xe0] sm:$0xff]
    %v199 = vld [vmem:[#allocation7 + $0xe8] sm:$0xff]
    %v200 = vld [vmem:[#allocation7 + $0xf0] sm:$0xff]
    %v201 = vld [vmem:[#allocation7 + $0xf8] sm:$0xff]
    %v202 = vlaneseq
    %v203 = vshrl.u32 %v202, 7
    %v204 = vsub.s32 2, %v203
    %v205 = vrot.slane %v70, %v204
    %v206 = vlaneseq
    %v207 = vshrl.u32 %v206, 7
    %v208 = vsub.s32 2, %v207
    %v209 = vrot.slane %v71, %v208
    %v242 = vunpack.c.l.b16 %v170
    %v243 = vunpack.c.h.b16 %v170
    %v244 = vunpack.c.l.b16 %v171
    %v245 = vunpack.c.h.b16 %v171
    %v246 = vunpack.c.l.b16 %v172
    %v247 = vunpack.c.h.b16 %v172
    %v248 = vunpack.c.l.b16 %v173
    %v249 = vunpack.c.h.b16 %v173
    %v250 = vunpack.c.l.b16 %v174
    %v251 = vunpack.c.h.b16 %v174
    %v252 = vunpack.c.l.b16 %v175
    %v253 = vunpack.c.h.b16 %v175
    %v254 = vunpack.c.l.b16 %v176
    %v255 = vunpack.c.h.b16 %v176
    %v256 = vunpack.c.l.b16 %v177
    %v257 = vunpack.c.h.b16 %v177
    %v258 = vunpack.c.l.b16 %v178
    %v259 = vunpack.c.h.b16 %v178
    %v260 = vunpack.c.l.b16 %v179
    %v261 = vunpack.c.h.b16 %v179
    %v262 = vunpack.c.l.b16 %v180
    %v263 = vunpack.c.h.b16 %v180
    %v264 = vunpack.c.l.b16 %v181
    %v265 = vunpack.c.h.b16 %v181
    %v266 = vunpack.c.l.b16 %v182
    %v267 = vunpack.c.h.b16 %v182
    %v268 = vunpack.c.l.b16 %v183
    %v269 = vunpack.c.h.b16 %v183
    %v270 = vunpack.c.l.b16 %v184
    %v271 = vunpack.c.h.b16 %v184
    %v272 = vunpack.c.l.b16 %v185
    %v273 = vunpack.c.h.b16 %v185
    %v274 = vunpack.c.l.b16 %v186
    %v275 = vunpack.c.h.b16 %v186
    %v276 = vunpack.c.l.b16 %v187
    %v277 = vunpack.c.h.b16 %v187
    %v278 = vunpack.c.l.b16 %v188
    %v279 = vunpack.c.h.b16 %v188
    %v280 = vunpack.c.l.b16 %v189
    %v281 = vunpack.c.h.b16 %v189
    %v282 = vunpack.c.l.b16 %v190
    %v283 = vunpack.c.h.b16 %v190
    %v284 = vunpack.c.l.b16 %v191
    %v285 = vunpack.c.h.b16 %v191
    %v286 = vunpack.c.l.b16 %v192
    %v287 = vunpack.c.h.b16 %v192
    %v288 = vunpack.c.l.b16 %v193
    %v289 = vunpack.c.h.b16 %v193
    %v290 = vunpack.c.l.b16 %v194
    %v291 = vunpack.c.h.b16 %v194
    %v292 = vunpack.c.l.b16 %v195
    %v293 = vunpack.c.h.b16 %v195
    %v294 = vunpack.c.l.b16 %v196
    %v295 = vunpack.c.h.b16 %v196
    %v296 = vunpack.c.l.b16 %v197
    %v297 = vunpack.c.h.b16 %v197
    %v298 = vunpack.c.l.b16 %v198
    %v299 = vunpack.c.h.b16 %v198
    %v300 = vunpack.c.l.b16 %v199
    %v301 = vunpack.c.h.b16 %v199
    %v302 = vunpack.c.l.b16 %v200
    %v303 = vunpack.c.h.b16 %v200
    %v304 = vunpack.c.l.b16 %v201
    %v305 = vunpack.c.h.b16 %v201
    %v306 = vpack.c.b16 %v244, %v242
    %v307 = vpack.c.b16 %v245, %v243
    %v308 = vpack.c.b16 %v248, %v246
    %v309 = vpack.c.b16 %v249, %v247
    %v310 = vpack.c.b16 %v252, %v250
    %v311 = vpack.c.b16 %v253, %v251
    %v312 = vpack.c.b16 %v256, %v254
    %v313 = vpack.c.b16 %v257, %v255
    %v314 = vpack.c.b16 %v260, %v258
    %v315 = vpack.c.b16 %v261, %v259
    %v316 = vpack.c.b16 %v264, %v262
    %v317 = vpack.c.b16 %v265, %v263
    %v318 = vpack.c.b16 %v268, %v266
    %v319 = vpack.c.b16 %v269, %v267
    %v320 = vpack.c.b16 %v272, %v270
    %v321 = vpack.c.b16 %v273, %v271
    %v322 = vpack.c.b16 %v276, %v274
    %v323 = vpack.c.b16 %v277, %v275
    %v324 = vpack.c.b16 %v280, %v278
    %v325 = vpack.c.b16 %v281, %v279
    %v326 = vpack.c.b16 %v284, %v282
    %v327 = vpack.c.b16 %v285, %v283
    %v328 = vpack.c.b16 %v288, %v286
    %v329 = vpack.c.b16 %v289, %v287
    %v330 = vpack.c.b16 %v292, %v290
    %v331 = vpack.c.b16 %v293, %v291
    %v332 = vpack.c.b16 %v296, %v294
    %v333 = vpack.c.b16 %v297, %v295
    %v334 = vpack.c.b16 %v300, %v298
    %v335 = vpack.c.b16 %v301, %v299
    %v336 = vpack.c.b16 %v304, %v302
    %v337 = vpack.c.b16 %v305, %v303
    %370 = vmatprep.subr.bf16.mxu0 %v307
    %371 = vmatpush1.bf16.msra.mxu0 %v306
    %372 = vmatprep.subr.bf16.mxu0 %v309
    %373 = vmatpush1.bf16.msra.mxu0 %v308
    %374 = vmatprep.subr.bf16.mxu0 %v311
    %375 = vmatpush1.bf16.msra.mxu0 %v310
    %376 = vmatprep.subr.bf16.mxu0 %v313
    %377 = vmatpush1.bf16.msra.mxu0 %v312
    %378 = vmatprep.subr.bf16.mxu0 %v315
    %379 = vmatpush1.bf16.msra.mxu0 %v314
    %380 = vmatprep.subr.bf16.mxu0 %v317
    %381 = vmatpush1.bf16.msra.mxu0 %v316
    %382 = vmatprep.subr.bf16.mxu0 %v319
    %383 = vmatpush1.bf16.msra.mxu0 %v318
    %384 = vmatprep.subr.bf16.mxu0 %v321
    %385 = vmatpush1.bf16.msra.mxu0 %v320
    %386 = vmatprep.subr.bf16.mxu0 %v323
    %387 = vmatpush1.bf16.msra.mxu0 %v322
    %388 = vmatprep.subr.bf16.mxu0 %v325
    %389 = vmatpush1.bf16.msra.mxu0 %v324
    %390 = vmatprep.subr.bf16.mxu0 %v327
    %391 = vmatpush1.bf16.msra.mxu0 %v326
    %392 = vmatprep.subr.bf16.mxu0 %v329
    %393 = vmatpush1.bf16.msra.mxu0 %v328
    %394 = vmatprep.subr.bf16.mxu0 %v331
    %395 = vmatpush1.bf16.msra.mxu0 %v330
    %396 = vmatprep.subr.bf16.mxu0 %v333
    %397 = vmatpush1.bf16.msra.mxu0 %v332
    %398 = vmatprep.subr.bf16.mxu0 %v335
    %399 = vmatpush1.bf16.msra.mxu0 %v334
    %400 = vmatprep.subr.bf16.mxu0 %v337
    %401 = vmatpush1.bf16.msra.mxu0 %v336
    %402 = vmatprep.mubr.bf16.mxu0 %v169
    %403 = vmatmul.mubr.bf16.gmra.mrb[0].mxu0 %v168
    %v404 = vpop.f32.mrb[0].mxu0
    %v405 = vadd.f32 %v205, %v404
    %v406 = vpop.f32.mrb[0].mxu0
    %v407 = vadd.f32 %v209, %v406
    %v408 = vpop.f32.mrb[0].mxu0
    %v409 = vpop.f32.mrb[0].mxu0
    %410 = vdwg.mxu0
    %411 = vrot.lane.b32.xlu0 %v405, 127
    %v412 = vpop.permute.xlu0 %411
    %413 = vrot.lane.b32.xlu0 %v407, 127
    %v414 = vpop.permute.xlu0 %413
    %v415 = vsel %vm86, %v412, %v414
    %v416 = vsel %vm86, %v414, %v412
    %417 = vrot.lane.b32.xlu0 %v405, 1
    %v418 = vpop.permute.xlu0 %417
    %419 = vrot.lane.b32.xlu0 %v407, 1
    %v420 = vpop.permute.xlu0 %419
    %v421 = vsel %vm93, %v418, %v420
    %v422 = vsel %vm93, %v420, %v418
    %v423 = vsel %vm77, %v415, %v422
    %v424 = vsel %vm78, %v416, %v421
    %v425 = vadd.f32 %v405, %v423
    %v426 = vadd.f32 %v407, %v424
    %v427 = vmul.f32 %v425, 0.5
    %v428 = vmul.f32 %v426, 0.5
    %v429 = vsub.f32 %v405, %v427
    %v430 = vsub.f32 %v407, %v428
    %v431 = vmul.f32 %v429, %v429
    %v432 = vmul.f32 %v430, %v430
    %433 = vrot.lane.b32.xlu0 %v431, 127
    %v434 = vpop.permute.xlu0 %433
    %435 = vrot.lane.b32.xlu0 %v432, 127
    %v436 = vpop.permute.xlu0 %435
    %v437 = vsel %vm86, %v434, %v436
    %v438 = vsel %vm86, %v436, %v434
    %439 = vrot.lane.b32.xlu0 %v431, 1
    %v440 = vpop.permute.xlu0 %439
    %441 = vrot.lane.b32.xlu0 %v432, 1
    %v442 = vpop.permute.xlu0 %441
    %v443 = vsel %vm93, %v440, %v442
    %v444 = vsel %vm93, %v442, %v440
    %v445 = vsel %vm77, %v437, %v444
    %v446 = vsel %vm78, %v438, %v443
    %v447 = vadd.f32 %v431, %v445
    %v448 = vadd.f32 %v432, %v446
    %v449 = vmul.f32 %v447, 0.5
    %v450 = vmul.f32 %v448, 0.5
    %v451 = vadd.f32 %v449, 1e-05
    %v452 = vadd.f32 %v450, 1e-05
    %v453 = vrsqrt.pop %v451
    %v454 = vrsqrt.pop %v452
    %v455 = vmul.f32 %v429, %v453
    %v456 = vmul.f32 %v430, %v454
    %v457 = vlaneseq
    %v458 = vshrl.u32 %v457, 7
    %v459 = vsub.s32 3, %v458
    %v460 = vrot.slane %v70, %v459
    %v461 = vlaneseq
    %v462 = vshrl.u32 %v461, 7
    %v463 = vsub.s32 3, %v462
    %v464 = vrot.slane %v71, %v463
    %v465 = vmul.f32 %v455, %v460
    %v466 = vmul.f32 %v456, %v464
    %v467 = vlaneseq
    %v468 = vshrl.u32 %v467, 7
    %v469 = vsub.s32 4, %v468
    %v470 = vrot.slane %v70, %v469
    %v471 = vlaneseq
    %v472 = vshrl.u32 %v471, 7
    %v473 = vsub.s32 4, %v472
    %v474 = vrot.slane %v71, %v473
    %v475 = vadd.f32 %v465, %v470
    %v476 = vadd.f32 %v466, %v474
    %v477 = vxor.u32 %v475, 2147483648
    %v478 = vxor.u32 %v476, 2147483648
    %v479 = vmul.f32 %v477, 1.442695
    %v480 = vpow.pop %v479
    %v481 = vmul.f32 %v478, 1.442695
    %v482 = vpow.pop %v481
    %v483 = vadd.f32 %v480, 1.0
    %v484 = vadd.f32 %v482, 1.0
    %v485 = vrcp.pop %v483
    %v486 = vmul.f32 1.0, %v485
    %v487 = vrcp.pop %v484
    %v488 = vmul.f32 1.0, %v487
    %v489 = vmul.f32 %v475, %v486
    %v490 = vmul.f32 %v476, %v488
    %v491 = vpack.c.bf16 %v489, %v489
    %v492 = vpack.c.bf16 %v490, %v490
    %v493 = vld [vmem:[#allocation8] sm:$0xff]
    %v494 = vld [vmem:[#allocation8 + $0x8] sm:$0xff]
    %v495 = vld [vmem:[#allocation8 + $0x10] sm:$0xff]
    %v496 = vld [vmem:[#allocation8 + $0x18] sm:$0xff]
    %v497 = vld [vmem:[#allocation8 + $0x20] sm:$0xff]
    %v498 = vld [vmem:[#allocation8 + $0x28] sm:$0xff]
    %v499 = vld [vmem:[#allocation8 + $0x30] sm:$0xff]
    %v500 = vld [vmem:[#allocation8 + $0x38] sm:$0xff]
    %v501 = vld [vmem:[#allocation8 + $0x40] sm:$0xff]
    %v502 = vld [vmem:[#allocation8 + $0x48] sm:$0xff]
    %v503 = vld [vmem:[#allocation8 + $0x50] sm:$0xff]
    %v504 = vld [vmem:[#allocation8 + $0x58] sm:$0xff]
    %v505 = vld [vmem:[#allocation8 + $0x60] sm:$0xff]
    %v506 = vld [vmem:[#allocation8 + $0x68] sm:$0xff]
    %v507 = vld [vmem:[#allocation8 + $0x70] sm:$0xff]
    %v508 = vld [vmem:[#allocation8 + $0x78] sm:$0xff]
    %v509 = vld [vmem:[#allocation8 + $0x80] sm:$0xff]
    %v510 = vld [vmem:[#allocation8 + $0x88] sm:$0xff]
    %v511 = vld [vmem:[#allocation8 + $0x90] sm:$0xff]
    %v512 = vld [vmem:[#allocation8 + $0x98] sm:$0xff]
    %v513 = vld [vmem:[#allocation8 + $0xa0] sm:$0xff]
    %v514 = vld [vmem:[#allocation8 + $0xa8] sm:$0xff]
    %v515 = vld [vmem:[#allocation8 + $0xb0] sm:$0xff]
    %v516 = vld [vmem:[#allocation8 + $0xb8] sm:$0xff]
    %v517 = vld [vmem:[#allocation8 + $0xc0] sm:$0xff]
    %v518 = vld [vmem:[#allocation8 + $0xc8] sm:$0xff]
    %v519 = vld [vmem:[#allocation8 + $0xd0] sm:$0xff]
    %v520 = vld [vmem:[#allocation8 + $0xd8] sm:$0xff]
    %v521 = vld [vmem:[#allocation8 + $0xe0] sm:$0xff]
    %v522 = vld [vmem:[#allocation8 + $0xe8] sm:$0xff]
    %v523 = vld [vmem:[#allocation8 + $0xf0] sm:$0xff]
    %v524 = vld [vmem:[#allocation8 + $0xf8] sm:$0xff]
    %v525 = vlaneseq
    %v526 = vshrl.u32 %v525, 7
    %v527 = vsub.s32 5, %v526
    %v528 = vrot.slane %v70, %v527
    %v529 = vlaneseq
    %v530 = vshrl.u32 %v529, 7
    %v531 = vsub.s32 5, %v530
    %v532 = vrot.slane %v71, %v531
    %v565 = vunpack.c.l.b16 %v493
    %v566 = vunpack.c.h.b16 %v493
    %v567 = vunpack.c.l.b16 %v494
    %v568 = vunpack.c.h.b16 %v494
    %v569 = vunpack.c.l.b16 %v495
    %v570 = vunpack.c.h.b16 %v495
    %v571 = vunpack.c.l.b16 %v496
    %v572 = vunpack.c.h.b16 %v496
    %v573 = vunpack.c.l.b16 %v497
    %v574 = vunpack.c.h.b16 %v497
    %v575 = vunpack.c.l.b16 %v498
    %v576 = vunpack.c.h.b16 %v498
    %v577 = vunpack.c.l.b16 %v499
    %v578 = vunpack.c.h.b16 %v499
    %v579 = vunpack.c.l.b16 %v500
    %v580 = vunpack.c.h.b16 %v500
    %v581 = vunpack.c.l.b16 %v501
    %v582 = vunpack.c.h.b16 %v501
    %v583 = vunpack.c.l.b16 %v502
    %v584 = vunpack.c.h.b16 %v502
    %v585 = vunpack.c.l.b16 %v503
    %v586 = vunpack.c.h.b16 %v503
    %v587 = vunpack.c.l.b16 %v504
    %v588 = vunpack.c.h.b16 %v504
    %v589 = vunpack.c.l.b16 %v505
    %v590 = vunpack.c.h.b16 %v505
    %v591 = vunpack.c.l.b16 %v506
    %v592 = vunpack.c.h.b16 %v506
    %v593 = vunpack.c.l.b16 %v507
    %v594 = vunpack.c.h.b16 %v507
    %v595 = vunpack.c.l.b16 %v508
    %v596 = vunpack.c.h.b16 %v508
    %v597 = vunpack.c.l.b16 %v509
    %v598 = vunpack.c.h.b16 %v509
    %v599 = vunpack.c.l.b16 %v510
    %v600 = vunpack.c.h.b16 %v510
    %v601 = vunpack.c.l.b16 %v511
    %v602 = vunpack.c.h.b16 %v511
    %v603 = vunpack.c.l.b16 %v512
    %v604 = vunpack.c.h.b16 %v512
    %v605 = vunpack.c.l.b16 %v513
    %v606 = vunpack.c.h.b16 %v513
    %v607 = vunpack.c.l.b16 %v514
    %v608 = vunpack.c.h.b16 %v514
    %v609 = vunpack.c.l.b16 %v515
    %v610 = vunpack.c.h.b16 %v515
    %v611 = vunpack.c.l.b16 %v516
    %v612 = vunpack.c.h.b16 %v516
    %v613 = vunpack.c.l.b16 %v517
    %v614 = vunpack.c.h.b16 %v517
    %v615 = vunpack.c.l.b16 %v518
    %v616 = vunpack.c.h.b16 %v518
    %v617 = vunpack.c.l.b16 %v519
    %v618 = vunpack.c.h.b16 %v519
    %v619 = vunpack.c.l.b16 %v520
    %v620 = vunpack.c.h.b16 %v520
    %v621 = vunpack.c.l.b16 %v521
    %v622 = vunpack.c.h.b16 %v521
    %v623 = vunpack.c.l.b16 %v522
    %v624 = vunpack.c.h.b16 %v522
    %v625 = vunpack.c.l.b16 %v523
    %v626 = vunpack.c.h.b16 %v523
    %v627 = vunpack.c.l.b16 %v524
    %v628 = vunpack.c.h.b16 %v524
    %v629 = vpack.c.b16 %v567, %v565
    %v630 = vpack.c.b16 %v568, %v566
    %v631 = vpack.c.b16 %v571, %v569
    %v632 = vpack.c.b16 %v572, %v570
    %v633 = vpack.c.b16 %v575, %v573
    %v634 = vpack.c.b16 %v576, %v574
    %v635 = vpack.c.b16 %v579, %v577
    %v636 = vpack.c.b16 %v580, %v578
    %v637 = vpack.c.b16 %v583, %v581
    %v638 = vpack.c.b16 %v584, %v582
    %v639 = vpack.c.b16 %v587, %v585
    %v640 = vpack.c.b16 %v588, %v586
    %v641 = vpack.c.b16 %v591, %v589
    %v642 = vpack.c.b16 %v592, %v590
    %v643 = vpack.c.b16 %v595, %v593
    %v644 = vpack.c.b16 %v596, %v594
    %v645 = vpack.c.b16 %v599, %v597
    %v646 = vpack.c.b16 %v600, %v598
    %v647 = vpack.c.b16 %v603, %v601
    %v648 = vpack.c.b16 %v604, %v602
    %v649 = vpack.c.b16 %v607, %v605
    %v650 = vpack.c.b16 %v608, %v606
    %v651 = vpack.c.b16 %v611, %v609
    %v652 = vpack.c.b16 %v612, %v610
    %v653 = vpack.c.b16 %v615, %v613
    %v654 = vpack.c.b16 %v616, %v614
    %v655 = vpack.c.b16 %v619, %v617
    %v656 = vpack.c.b16 %v620, %v618
    %v657 = vpack.c.b16 %v623, %v621
    %v658 = vpack.c.b16 %v624, %v622
    %v659 = vpack.c.b16 %v627, %v625
    %v660 = vpack.c.b16 %v628, %v626
    %693 = vmatprep.subr.bf16.mxu0 %v630
    %694 = vmatpush1.bf16.msra.mxu0 %v629
    %695 = vmatprep.subr.bf16.mxu0 %v632
    %696 = vmatpush1.bf16.msra.mxu0 %v631
    %697 = vmatprep.subr.bf16.mxu0 %v634
    %698 = vmatpush1.bf16.msra.mxu0 %v633
    %699 = vmatprep.subr.bf16.mxu0 %v636
    %700 = vmatpush1.bf16.msra.mxu0 %v635
    %701 = vmatprep.subr.bf16.mxu0 %v638
    %702 = vmatpush1.bf16.msra.mxu0 %v637
    %703 = vmatprep.subr.bf16.mxu0 %v640
    %704 = vmatpush1.bf16.msra.mxu0 %v639
    %705 = vmatprep.subr.bf16.mxu0 %v642
    %706 = vmatpush1.bf16.msra.mxu0 %v641
    %707 = vmatprep.subr.bf16.mxu0 %v644
    %708 = vmatpush1.bf16.msra.mxu0 %v643
    %709 = vmatprep.subr.bf16.mxu0 %v646
    %710 = vmatpush1.bf16.msra.mxu0 %v645
    %711 = vmatprep.subr.bf16.mxu0 %v648
    %712 = vmatpush1.bf16.msra.mxu0 %v647
    %713 = vmatprep.subr.bf16.mxu0 %v650
    %714 = vmatpush1.bf16.msra.mxu0 %v649
    %715 = vmatprep.subr.bf16.mxu0 %v652
    %716 = vmatpush1.bf16.msra.mxu0 %v651
    %717 = vmatprep.subr.bf16.mxu0 %v654
    %718 = vmatpush1.bf16.msra.mxu0 %v653
    %719 = vmatprep.subr.bf16.mxu0 %v656
    %720 = vmatpush1.bf16.msra.mxu0 %v655
    %721 = vmatprep.subr.bf16.mxu0 %v658
    %722 = vmatpush1.bf16.msra.mxu0 %v657
    %723 = vmatprep.subr.bf16.mxu0 %v660
    %724 = vmatpush1.bf16.msra.mxu0 %v659
    %725 = vmatprep.mubr.bf16.mxu0 %v492
    %726 = vmatmul.mubr.bf16.gmra.mrb[0].mxu0 %v491
    %v727 = vpop.f32.mrb[0].mxu0
    %v728 = vadd.f32 %v528, %v727
    %v729 = vpop.f32.mrb[0].mxu0
    %v730 = vadd.f32 %v532, %v729
    %v731 = vpop.f32.mrb[0].mxu0
    %v732 = vpop.f32.mrb[0].mxu0
    %733 = vdwg.mxu0
    %v734 = vadd.f32 %v728, %v69
    %v735 = vadd.f32 %v730, %v80
    %v738 = vcombine.low %v734, %v735
    %740 = vst [vmem:[#allocation10] sm:$0xff] %v738
    // Predicated region
    $region34: #{tpu_custom_call.1} parent=1 // pred_check
      _
    $region35: #{tpu_custom_call.1} parent=1 // pred_check_branch
      %742 = sbr.rel (0) target = $region37
    $region36: #{tpu_custom_call.1} parent=1 // pred_region
      %s744 = ssub.s32 128, 128
      %745 = vsyncadd [#allocation4], %s744
      %s747 = sshll.u32 [#allocation10], 4
      %s748 = int_to_ptr.vmem [resolvable:$true] %s747
      %750 = dma.vmem_to_hbm [thread:$0]  %s748, 128, %s4, [#allocation4]
    $region37: #{tpu_custom_call.1} parent=1 // pred_fallthru
      _
    // Predicated region
    $region38: #{tpu_custom_call.1} parent=1 // pred_check
      _
    $region39: #{tpu_custom_call.1} parent=1 // pred_check_branch
      %752 = sbr.rel (0) target = $region41
    $region40: #{tpu_custom_call.1} parent=1 // pred_region
      %753 = dma.done [#allocation4], 128
    $region41: #{tpu_custom_call.1} parent=1 // pred_fallthru
      _
    %754 = vsyncpa [#allocation3], 1
    %755 = vsyncpa [#allocation6], 1
    %756 = vsyncpa [#allocation9], 1
    %757 = vsyncpa [#allocation4], 1

</llo_original>
